<compile_context>
chip_gen: v5e
topology: v5e:2x2
jax: 0.10.0
libtpu: 0.0.40
codegen_flags: <defaults>
</compile_context>

<pallas_src>
import functools

import jax
import jax.numpy as jnp
from jax.experimental import pallas as pl
from jax.experimental.pallas import tpu as pltpu


def _round_up(n, m):
    return ((n + m - 1) // m) * m


def _tpu_kind():
    try:
        return (jax.devices()[0].device_kind or "").lower()
    except Exception:
        return ""


def _vae_kernel(x_ref, eps_ref,
                w1_ref, b1_ref, w2_ref, b2_ref,
                wml_ref, bml_ref,
                w3_ref, b3_ref, w4_ref, b4_ref,
                w5_ref, b5_ref, pml_ref,
                out_ref, *, lat_pad, act_dtype):
    f32, bf16 = jnp.float32, jnp.bfloat16
    act = act_dtype

    x = x_ref[...]                                             # bf16 [TB, input_dim]

    # ---- encode: bf16 MXU operands; elementwise in `act` (f32 on v5e, bf16 on v6e/v7x) ----
    h = jnp.dot(x, w1_ref[...], preferred_element_type=act) + b1_ref[...].astype(act)
    h = jnp.maximum(h, 0).astype(bf16)
    h = jnp.dot(h, w2_ref[...], preferred_element_type=act) + b2_ref[...].astype(act)
    h = jnp.maximum(h, 0).astype(bf16)

    # ---- fused, lane-padded mean||log_var head (f32 for tanh/exp accuracy) ----
    # padded lanes have zero weights & bias -> tanh(0) = 0 exactly.
    ml = jnp.tanh(jnp.dot(h, wml_ref[...], preferred_element_type=f32) + bml_ref[...])
    mu = ml[:, :lat_pad]                                       # full-vreg slice [TB, 128]
    log_var = ml[:, lat_pad:]                                  # full-vreg slice [TB, 128]

    # ---- reparameterize (f32); padded lanes stay exactly zero (eps pad = 0) ----
    z = (mu + eps_ref[...] * jnp.exp(0.5 * log_var)).astype(bf16)   # lane-dense [TB, 128]

    # ---- decode ----
    d = jnp.dot(z, w3_ref[...], preferred_element_type=act) + b3_ref[...].astype(act)
    d = jnp.maximum(d, 0).astype(bf16)
    d = jnp.dot(d, w4_ref[...], preferred_element_type=act) + b4_ref[...].astype(act)
    d = jnp.maximum(d, 0).astype(bf16)
    # fc5 is column-padded: recon pad lanes are exactly zero.
    recon = jnp.dot(d, w5_ref[...], preferred_element_type=f32) + b5_ref[...]   # f32 [TB, out_w]

    # ---- pack recon | mu | log_var via a 0/1 placement matmul (MXU is idle) ----
    # avoids lane-rotate / masked-select concatenation; exact (single product per lane).
    placed = jnp.dot(ml.astype(bf16), pml_ref[...], preferred_element_type=f32)
    out_ref[...] = (recon + placed).astype(out_ref.dtype)      # one lane-dense bf16 store


def prepare_params(params):
    """One-time packing of the f32 params into kernel-ready layout (hoisted out of
    the per-call hot path). Returns (weights_tuple, latent_dim)."""
    f32, bf16 = jnp.float32, jnp.bfloat16
    w1, b1 = params["fc1"]
    w2, b2 = params["fc2"]
    wm, bm = params["fc_mean"]
    wlv, blv = params["fc_log_var"]
    w3, b3 = params["fc3"]
    w4, b4 = params["fc4"]
    w5, b5 = params["fc5"]

    input_dim = int(w1.shape[0])
    latent_dim = int(wm.shape[1])
    lat_pad = _round_up(latent_dim, 128)
    out_w = _round_up(input_dim + 2 * latent_dim, 128)

    # fused + lane-padded mean||log_var head: mean -> lanes [0,lat_pad), log_var -> [lat_pad, 2*lat_pad)
    wml = jnp.zeros((w2.shape[1], 2 * lat_pad), f32)
    wml = wml.at[:, :latent_dim].set(wm)
    wml = wml.at[:, lat_pad:lat_pad + latent_dim].set(wlv)
    bml = jnp.zeros((2 * lat_pad,), f32)
    bml = bml.at[:latent_dim].set(bm)
    bml = bml.at[lat_pad:lat_pad + latent_dim].set(blv)

    # fc3: input rows padded to lat_pad (padded z lanes are exactly zero anyway)
    w3p = jnp.zeros((lat_pad, w3.shape[1]), f32).at[:latent_dim, :].set(w3)

    # fc5: output columns padded to out_w so recon is a lane-dense slab with zero pad lanes
    w5p = jnp.zeros((w5.shape[0], out_w), f32).at[:, :input_dim].set(w5)
    b5p = jnp.zeros((out_w,), f32).at[:input_dim].set(b5)

    # 0/1 placement matrix: mu -> lanes [input_dim, input_dim+latent),
    #                       log_var -> lanes [input_dim+latent, input_dim+2*latent)
    idx = jnp.arange(latent_dim)
    pml = jnp.zeros((2 * lat_pad, out_w), f32)
    pml = pml.at[idx, input_dim + idx].set(1.0)
    pml = pml.at[lat_pad + idx, input_dim + latent_dim + idx].set(1.0)

    W = lambda w: w.astype(bf16)                  # MXU operands
    Bv = lambda b: b.reshape(1, -1).astype(f32)   # biases as f32 row vectors

    weights = (W(w1), Bv(b1), W(w2), Bv(b2), W(wml), Bv(bml),
               W(w3p), Bv(b3), W(w4), Bv(b4), W(w5p), Bv(b5p), W(pml))
    return weights, latent_dim


def vae_forward(x, eps, weights, latent_dim, *, max_rows_per_step=1024):
    """x: [B, input_dim] f32, eps: [B, latent_dim] f32, weights: prepare_params() output."""
    B, input_dim = x.shape
    lat_pad = _round_up(latent_dim, 128)
    out_w = _round_up(input_dim + 2 * latent_dim, 128)

    kind = _tpu_kind()
    # two TensorCores per device (megacore): v4 / v5p / v7x -> shard the batch grid across them
    num_cores = 2 if any(t in kind for t in ("7x", "v7", "v5p", "v4")) else 1
    # bf16 VALUs only on v6e / v7x; keep f32 elementwise elsewhere (v5e has no bf16 VPU)
    act_dtype = jnp.bfloat16 if any(t in kind for t in ("v6", "v7", "7x")) else jnp.float32

    # Grid shaping: one step per core; pad batch only to the next multiple of 16 per step.
    n_steps = max(num_cores, -(-B // max_rows_per_step))
    n_steps = -(-n_steps // num_cores) * num_cores
    TB = _round_up(-(-B // n_steps), 16)
    B_pad = TB * n_steps

    x_p = x.astype(jnp.bfloat16)
    if B_pad != B:
        x_p = jnp.pad(x_p, ((0, B_pad - B), (0, 0)))
    eps_p = jnp.pad(eps.astype(jnp.float32),
                    ((0, B_pad - B), (0, lat_pad - latent_dim)))

    grid = (n_steps,)
    const = lambda i: (0, 0)                                   # weights stay VMEM-resident
    in_specs = ([pl.BlockSpec((TB, input_dim), lambda i: (i, 0)),
                 pl.BlockSpec((TB, lat_pad), lambda i: (i, 0))]
                + [pl.BlockSpec(w.shape, const) for w in weights])
    out_specs = pl.BlockSpec((TB, out_w), lambda i: (i, 0))

    flops = 2 * B_pad * (input_dim * 256 + 256 * 128 + 128 * 2 * lat_pad
                         + lat_pad * 128 + 128 * 256 + 256 * out_w
                         + 2 * lat_pad * out_w)
    transcendentals = B_pad * 3 * lat_pad                      # tanh(2*lat_pad) + exp(lat_pad)
    bytes_accessed = int(x_p.size * 2 + eps_p.size * 4
                         + sum(w.size * w.dtype.itemsize for w in weights)
                         + B_pad * out_w * 2)

    kernel = functools.partial(_vae_kernel, lat_pad=lat_pad, act_dtype=act_dtype)
    packed = pl.pallas_call(
        kernel,
        out_shape=jax.ShapeDtypeStruct((B_pad, out_w), jnp.bfloat16),
        grid=grid,
        in_specs=in_specs,
        out_specs=out_specs,
        compiler_params=pltpu.CompilerParams(dimension_semantics=("parallel",)),
        cost_estimate=pl.CostEstimate(flops=flops,
                                      transcendentals=transcendentals,
                                      bytes_accessed=bytes_accessed),
    )(x_p, eps_p, *weights)

    recon = packed[:B, :input_dim].astype(jnp.float32)
    mu = packed[:B, input_dim:input_dim + latent_dim].astype(jnp.float32)
    log_var = packed[:B, input_dim + latent_dim:input_dim + 2 * latent_dim].astype(jnp.float32)
    return recon, mu, log_var


def init_linear(key, fan_in, fan_out):
    """PyTorch nn.Linear default init: U(-1/sqrt(fan_in), 1/sqrt(fan_in))."""
    kw, kb = jax.random.split(key)
    bound = 1.0 / jnp.sqrt(jnp.float32(fan_in))
    w = jax.random.uniform(kw, (fan_in, fan_out), jnp.float32, -bound, bound)
    b = jax.random.uniform(kb, (fan_out,), jnp.float32, -bound, bound)
    return w, b


if __name__ == "__main__":
    # Shapes consistent with the module: env obs (8, 8), stack=1 -> input_dim = 64;
    # latent_dim = 16.  Small batch of 128 (one grid step on 1-TC chips, two on 2-TC chips).
    B = 128
    input_dim = 64
    latent_dim = 16

    root = jax.random.PRNGKey(0)
    keys = jax.random.split(root, 9)

    params = {
        "fc1": init_linear(keys[0], input_dim, 256),
        "fc2": init_linear(keys[1], 256, 128),
        "fc_mean": init_linear(keys[2], 128, latent_dim),
        "fc_log_var": init_linear(keys[3], 128, latent_dim),
        "fc3": init_linear(keys[4], latent_dim, 128),
        "fc4": init_linear(keys[5], 128, 256),
        "fc5": init_linear(keys[6], 256, input_dim),
    }

    x = jax.random.normal(keys[7], (B, input_dim), jnp.float32)
    eps = jax.random.normal(keys[8], (B, latent_dim), jnp.float32)

    # One-time param packing (hoisted out of the hot path), then jit the forward.
    weights, latent_dim_s = prepare_params(params)
    fwd = jax.jit(functools.partial(vae_forward, latent_dim=latent_dim_s))

    recon, mu, log_var = fwd(x, eps, weights)
    jax.block_until_ready((recon, mu, log_var))

    # Pure-JAX f32 reference check (kernel uses bf16 MXU operands and bf16 output
    # -> loose tolerances).
    def ref(x, eps, p):
        def lin(h, name):
            w, b = p[name]
            return h @ w + b
        h = jax.nn.relu(lin(x, "fc1"))
        h = jax.nn.relu(lin(h, "fc2"))
        mu = jnp.tanh(lin(h, "fc_mean"))
        lv = jnp.tanh(lin(h, "fc_log_var"))
        z = mu + eps * jnp.exp(0.5 * lv)
        d = jax.nn.relu(lin(z, "fc3"))
        d = jax.nn.relu(lin(d, "fc4"))
        return lin(d, "fc5"), mu, lv

    r_ref, mu_ref, lv_ref = ref(x, eps, params)
    assert recon.shape == (B, input_dim) and mu.shape == (B, latent_dim)
    assert log_var.shape == (B, latent_dim)
    assert jnp.allclose(mu, mu_ref, atol=6e-2, rtol=6e-2)
    assert jnp.allclose(log_var, lv_ref, atol=6e-2, rtol=6e-2)
    assert jnp.allclose(recon, r_ref, atol=2e-1, rtol=2e-1)
    print("KERNEL_OK")
</pallas_src>

<mosaic_0001>
module attributes {stable_mosaic.version = 11 : i64} {
  func.func @_vae_kernel(%arg0: i32, %arg1: memref<128x64xbf16, #tpu.memory_space<vmem>>, %arg2: memref<128x128xf32, #tpu.memory_space<vmem>>, %arg3: memref<64x256xbf16, #tpu.memory_space<vmem>>, %arg4: memref<1x256xf32, #tpu.memory_space<vmem>>, %arg5: memref<256x128xbf16, #tpu.memory_space<vmem>>, %arg6: memref<1x128xf32, #tpu.memory_space<vmem>>, %arg7: memref<128x256xbf16, #tpu.memory_space<vmem>>, %arg8: memref<1x256xf32, #tpu.memory_space<vmem>>, %arg9: memref<128x128xbf16, #tpu.memory_space<vmem>>, %arg10: memref<1x128xf32, #tpu.memory_space<vmem>>, %arg11: memref<128x256xbf16, #tpu.memory_space<vmem>>, %arg12: memref<1x256xf32, #tpu.memory_space<vmem>>, %arg13: memref<256x128xbf16, #tpu.memory_space<vmem>>, %arg14: memref<1x128xf32, #tpu.memory_space<vmem>>, %arg15: memref<256x128xbf16, #tpu.memory_space<vmem>>, %arg16: memref<128x128xbf16, #tpu.memory_space<vmem>>) attributes {dimension_semantics = [#tpu.dimension_semantics<parallel>], iteration_bounds = array<i64: 1>, scalar_prefetch = 0 : i64, scratch_operands = 0 : i64, tpu.core_type = #tpu.core_type<tc>, window_params = [{transform_indices = @transform_0, window_bounds = array<i64: 128, 64>}, {transform_indices = @transform_1, window_bounds = array<i64: 128, 128>}, {pipeline_mode = #tpu.pipeline_mode<synchronous>, transform_indices = @transform_2, window_bounds = array<i64: 64, 256>}, {pipeline_mode = #tpu.pipeline_mode<synchronous>, transform_indices = @transform_3, window_bounds = array<i64: 1, 256>}, {pipeline_mode = #tpu.pipeline_mode<synchronous>, transform_indices = @transform_4, window_bounds = array<i64: 256, 128>}, {pipeline_mode = #tpu.pipeline_mode<synchronous>, transform_indices = @transform_5, window_bounds = array<i64: 1, 128>}, {pipeline_mode = #tpu.pipeline_mode<synchronous>, transform_indices = @transform_6, window_bounds = array<i64: 128, 256>}, {pipeline_mode = #tpu.pipeline_mode<synchronous>, transform_indices = @transform_7, window_bounds = array<i64: 1, 256>}, {pipeline_mode = #tpu.pipeline_mode<synchronous>, transform_indices = @transform_8, window_bounds = array<i64: 128, 128>}, {pipeline_mode = #tpu.pipeline_mode<synchronous>, transform_indices = @transform_9, window_bounds = array<i64: 1, 128>}, {pipeline_mode = #tpu.pipeline_mode<synchronous>, transform_indices = @transform_10, window_bounds = array<i64: 128, 256>}, {pipeline_mode = #tpu.pipeline_mode<synchronous>, transform_indices = @transform_11, window_bounds = array<i64: 1, 256>}, {pipeline_mode = #tpu.pipeline_mode<synchronous>, transform_indices = @transform_12, window_bounds = array<i64: 256, 128>}, {pipeline_mode = #tpu.pipeline_mode<synchronous>, transform_indices = @transform_13, window_bounds = array<i64: 1, 128>}, {pipeline_mode = #tpu.pipeline_mode<synchronous>, transform_indices = @transform_14, window_bounds = array<i64: 256, 128>}, {transform_indices = @transform_15, window_bounds = array<i64: 128, 128>}]} {
    %c0 = arith.constant 0 : index
    %c0_0 = arith.constant 0 : index
    %0 = vector.load %arg1[%c0, %c0_0] : memref<128x64xbf16, #tpu.memory_space<vmem>>, vector<128x64xbf16>
    %c0_1 = arith.constant 0 : index
    %c0_2 = arith.constant 0 : index
    %1 = vector.load %arg3[%c0_1, %c0_2] : memref<64x256xbf16, #tpu.memory_space<vmem>>, vector<64x256xbf16>
    %cst = arith.constant dense<0.000000e+00> : vector<128x256xf32>
    %2 = tpu.matmul %0, %1, %cst {dimension_numbers = #tpu.dot_dimension_numbers<[1], [0], [0], [1], [0, 0, 1, 1], [], []>} : vector<128x64xbf16>, vector<64x256xbf16>, vector<128x256xf32> -> vector<128x256xf32>
    %c0_3 = arith.constant 0 : index
    %c0_4 = arith.constant 0 : index
    %3 = vector.load %arg4[%c0_3, %c0_4] : memref<1x256xf32, #tpu.memory_space<vmem>>, vector<1x256xf32>
    %4 = vector.broadcast %3 : vector<1x256xf32> to vector<128x256xf32>
    %5 = arith.addf %2, %4 : vector<128x256xf32>
    %cst_5 = arith.constant 0.000000e+00 : f32
    %6 = vector.broadcast %cst_5 : f32 to vector<128x256xf32>
    %7 = arith.maximumf %5, %6 : vector<128x256xf32>
    %8 = arith.truncf %7 : vector<128x256xf32> to vector<128x256xbf16>
    %c0_6 = arith.constant 0 : index
    %c0_7 = arith.constant 0 : index
    %9 = vector.load %arg5[%c0_6, %c0_7] : memref<256x128xbf16, #tpu.memory_space<vmem>>, vector<256x128xbf16>
    %cst_8 = arith.constant dense<0.000000e+00> : vector<128x128xf32>
    %10 = tpu.matmul %8, %9, %cst_8 {dimension_numbers = #tpu.dot_dimension_numbers<[1], [0], [0], [1], [0, 0, 1, 1], [], []>} : vector<128x256xbf16>, vector<256x128xbf16>, vector<128x128xf32> -> vector<128x128xf32>
    %c0_9 = arith.constant 0 : index
    %c0_10 = arith.constant 0 : index
    %11 = vector.load %arg6[%c0_9, %c0_10] : memref<1x128xf32, #tpu.memory_space<vmem>>, vector<1x128xf32>
    %12 = vector.broadcast %11 : vector<1x128xf32> to vector<128x128xf32>
    %13 = arith.addf %10, %12 : vector<128x128xf32>
    %cst_11 = arith.constant 0.000000e+00 : f32
    %14 = vector.broadcast %cst_11 : f32 to vector<128x128xf32>
    %15 = arith.maximumf %13, %14 : vector<128x128xf32>
    %16 = arith.truncf %15 : vector<128x128xf32> to vector<128x128xbf16>
    %c0_12 = arith.constant 0 : index
    %c0_13 = arith.constant 0 : index
    %17 = vector.load %arg7[%c0_12, %c0_13] : memref<128x256xbf16, #tpu.memory_space<vmem>>, vector<128x256xbf16>
    %cst_14 = arith.constant dense<0.000000e+00> : vector<128x256xf32>
    %18 = tpu.matmul %16, %17, %cst_14 {dimension_numbers = #tpu.dot_dimension_numbers<[1], [0], [0], [1], [0, 0, 1, 1], [], []>} : vector<128x128xbf16>, vector<128x256xbf16>, vector<128x256xf32> -> vector<128x256xf32>
    %c0_15 = arith.constant 0 : index
    %c0_16 = arith.constant 0 : index
    %19 = vector.load %arg8[%c0_15, %c0_16] : memref<1x256xf32, #tpu.memory_space<vmem>>, vector<1x256xf32>
    %20 = vector.broadcast %19 : vector<1x256xf32> to vector<128x256xf32>
    %21 = arith.addf %18, %20 : vector<128x256xf32>
    %22 = math.tanh %21 : vector<128x256xf32>
    %23 = vector.extract_strided_slice %22 {offsets = [0, 0], sizes = [128, 128], strides = [1, 1]} : vector<128x256xf32> to vector<128x128xf32>
    %24 = vector.extract_strided_slice %22 {offsets = [0, 128], sizes = [128, 128], strides = [1, 1]} : vector<128x256xf32> to vector<128x128xf32>
    %c0_17 = arith.constant 0 : index
    %c0_18 = arith.constant 0 : index
    %25 = vector.load %arg2[%c0_17, %c0_18] : memref<128x128xf32, #tpu.memory_space<vmem>>, vector<128x128xf32>
    %cst_19 = arith.constant 5.000000e-01 : f32
    %26 = vector.broadcast %cst_19 : f32 to vector<128x128xf32>
    %27 = arith.mulf %26, %24 : vector<128x128xf32>
    %28 = math.exp %27 : vector<128x128xf32>
    %29 = arith.mulf %25, %28 : vector<128x128xf32>
    %30 = arith.addf %23, %29 : vector<128x128xf32>
    %31 = arith.truncf %30 : vector<128x128xf32> to vector<128x128xbf16>
    %c0_20 = arith.constant 0 : index
    %c0_21 = arith.constant 0 : index
    %32 = vector.load %arg9[%c0_20, %c0_21] : memref<128x128xbf16, #tpu.memory_space<vmem>>, vector<128x128xbf16>
    %cst_22 = arith.constant dense<0.000000e+00> : vector<128x128xf32>
    %33 = tpu.matmul %31, %32, %cst_22 {dimension_numbers = #tpu.dot_dimension_numbers<[1], [0], [0], [1], [0, 0, 1, 1], [], []>} : vector<128x128xbf16>, vector<128x128xbf16>, vector<128x128xf32> -> vector<128x128xf32>
    %c0_23 = arith.constant 0 : index
    %c0_24 = arith.constant 0 : index
    %34 = vector.load %arg10[%c0_23, %c0_24] : memref<1x128xf32, #tpu.memory_space<vmem>>, vector<1x128xf32>
    %35 = vector.broadcast %34 : vector<1x128xf32> to vector<128x128xf32>
    %36 = arith.addf %33, %35 : vector<128x128xf32>
    %cst_25 = arith.constant 0.000000e+00 : f32
    %37 = vector.broadcast %cst_25 : f32 to vector<128x128xf32>
    %38 = arith.maximumf %36, %37 : vector<128x128xf32>
    %39 = arith.truncf %38 : vector<128x128xf32> to vector<128x128xbf16>
    %c0_26 = arith.constant 0 : index
    %c0_27 = arith.constant 0 : index
    %40 = vector.load %arg11[%c0_26, %c0_27] : memref<128x256xbf16, #tpu.memory_space<vmem>>, vector<128x256xbf16>
    %cst_28 = arith.constant dense<0.000000e+00> : vector<128x256xf32>
    %41 = tpu.matmul %39, %40, %cst_28 {dimension_numbers = #tpu.dot_dimension_numbers<[1], [0], [0], [1], [0, 0, 1, 1], [], []>} : vector<128x128xbf16>, vector<128x256xbf16>, vector<128x256xf32> -> vector<128x256xf32>
    %c0_29 = arith.constant 0 : index
    %c0_30 = arith.constant 0 : index
    %42 = vector.load %arg12[%c0_29, %c0_30] : memref<1x256xf32, #tpu.memory_space<vmem>>, vector<1x256xf32>
    %43 = vector.broadcast %42 : vector<1x256xf32> to vector<128x256xf32>
    %44 = arith.addf %41, %43 : vector<128x256xf32>
    %cst_31 = arith.constant 0.000000e+00 : f32
    %45 = vector.broadcast %cst_31 : f32 to vector<128x256xf32>
    %46 = arith.maximumf %44, %45 : vector<128x256xf32>
    %47 = arith.truncf %46 : vector<128x256xf32> to vector<128x256xbf16>
    %c0_32 = arith.constant 0 : index
    %c0_33 = arith.constant 0 : index
    %48 = vector.load %arg13[%c0_32, %c0_33] : memref<256x128xbf16, #tpu.memory_space<vmem>>, vector<256x128xbf16>
    %cst_34 = arith.constant dense<0.000000e+00> : vector<128x128xf32>
    %49 = tpu.matmul %47, %48, %cst_34 {dimension_numbers = #tpu.dot_dimension_numbers<[1], [0], [0], [1], [0, 0, 1, 1], [], []>} : vector<128x256xbf16>, vector<256x128xbf16>, vector<128x128xf32> -> vector<128x128xf32>
    %c0_35 = arith.constant 0 : index
    %c0_36 = arith.constant 0 : index
    %50 = vector.load %arg14[%c0_35, %c0_36] : memref<1x128xf32, #tpu.memory_space<vmem>>, vector<1x128xf32>
    %51 = vector.broadcast %50 : vector<1x128xf32> to vector<128x128xf32>
    %52 = arith.addf %49, %51 : vector<128x128xf32>
    %53 = arith.truncf %22 : vector<128x256xf32> to vector<128x256xbf16>
    %c0_37 = arith.constant 0 : index
    %c0_38 = arith.constant 0 : index
    %54 = vector.load %arg15[%c0_37, %c0_38] : memref<256x128xbf16, #tpu.memory_space<vmem>>, vector<256x128xbf16>
    %cst_39 = arith.constant dense<0.000000e+00> : vector<128x128xf32>
    %55 = tpu.matmul %53, %54, %cst_39 {dimension_numbers = #tpu.dot_dimension_numbers<[1], [0], [0], [1], [0, 0, 1, 1], [], []>} : vector<128x256xbf16>, vector<256x128xbf16>, vector<128x128xf32> -> vector<128x128xf32>
    %56 = arith.addf %52, %55 : vector<128x128xf32>
    %57 = arith.truncf %56 : vector<128x128xf32> to vector<128x128xbf16>
    %c0_40 = arith.constant 0 : index
    %c0_41 = arith.constant 0 : index
    %58 = vector.load %arg16[%c0_40, %c0_41] : memref<128x128xbf16, #tpu.memory_space<vmem>>, vector<128x128xbf16>
    tpu.vector_store %arg16[%c0_40, %c0_41], %57 {strides = array<i32>} : memref<128x128xbf16, #tpu.memory_space<vmem>>, vector<128x128xbf16>,
    return
  }
  func.func @transform_0(%arg0: i32) -> (i32, i32) {
    %c0_i32 = arith.constant 0 : i32
    %c0_i32_0 = arith.constant 0 : i32
    return %arg0, %c0_i32 : i32, i32
  }
  func.func @transform_1(%arg0: i32) -> (i32, i32) {
    %c0_i32 = arith.constant 0 : i32
    %c0_i32_0 = arith.constant 0 : i32
    return %arg0, %c0_i32 : i32, i32
  }
  func.func @transform_2(%arg0: i32) -> (i32, i32) {
    %c0_i32 = arith.constant 0 : i32
    %c0_i32_0 = arith.constant 0 : i32
    %c0_i32_1 = arith.constant 0 : i32
    return %c0_i32, %c0_i32_0 : i32, i32
  }
  func.func @transform_3(%arg0: i32) -> (i32, i32) {
    %c0_i32 = arith.constant 0 : i32
    %c0_i32_0 = arith.constant 0 : i32
    %c0_i32_1 = arith.constant 0 : i32
    return %c0_i32, %c0_i32_0 : i32, i32
  }
  func.func @transform_4(%arg0: i32) -> (i32, i32) {
    %c0_i32 = arith.constant 0 : i32
    %c0_i32_0 = arith.constant 0 : i32
    %c0_i32_1 = arith.constant 0 : i32
    return %c0_i32, %c0_i32_0 : i32, i32
  }
  func.func @transform_5(%arg0: i32) -> (i32, i32) {
    %c0_i32 = arith.constant 0 : i32
    %c0_i32_0 = arith.constant 0 : i32
    %c0_i32_1 = arith.constant 0 : i32
    return %c0_i32, %c0_i32_0 : i32, i32
  }
  func.func @transform_6(%arg0: i32) -> (i32, i32) {
    %c0_i32 = arith.constant 0 : i32
    %c0_i32_0 = arith.constant 0 : i32
    %c0_i32_1 = arith.constant 0 : i32
    return %c0_i32, %c0_i32_0 : i32, i32
  }
  func.func @transform_7(%arg0: i32) -> (i32, i32) {
    %c0_i32 = arith.constant 0 : i32
    %c0_i32_0 = arith.constant 0 : i32
    %c0_i32_1 = arith.constant 0 : i32
    return %c0_i32, %c0_i32_0 : i32, i32
  }
  func.func @transform_8(%arg0: i32) -> (i32, i32) {
    %c0_i32 = arith.constant 0 : i32
    %c0_i32_0 = arith.constant 0 : i32
    %c0_i32_1 = arith.constant 0 : i32
    return %c0_i32, %c0_i32_0 : i32, i32
  }
  func.func @transform_9(%arg0: i32) -> (i32, i32) {
    %c0_i32 = arith.constant 0 : i32
    %c0_i32_0 = arith.constant 0 : i32
    %c0_i32_1 = arith.constant 0 : i32
    return %c0_i32, %c0_i32_0 : i32, i32
  }
  func.func @transform_10(%arg0: i32) -> (i32, i32) {
    %c0_i32 = arith.constant 0 : i32
    %c0_i32_0 = arith.constant 0 : i32
    %c0_i32_1 = arith.constant 0 : i32
    return %c0_i32, %c0_i32_0 : i32, i32
  }
  func.func @transform_11(%arg0: i32) -> (i32, i32) {
    %c0_i32 = arith.constant 0 : i32
    %c0_i32_0 = arith.constant 0 : i32
    %c0_i32_1 = arith.constant 0 : i32
    return %c0_i32, %c0_i32_0 : i32, i32
  }
  func.func @transform_12(%arg0: i32) -> (i32, i32) {
    %c0_i32 = arith.constant 0 : i32
    %c0_i32_0 = arith.constant 0 : i32
    %c0_i32_1 = arith.constant 0 : i32
    return %c0_i32, %c0_i32_0 : i32, i32
  }
  func.func @transform_13(%arg0: i32) -> (i32, i32) {
    %c0_i32 = arith.constant 0 : i32
    %c0_i32_0 = arith.constant 0 : i32
    %c0_i32_1 = arith.constant 0 : i32
    return %c0_i32, %c0_i32_0 : i32, i32
  }
  func.func @transform_14(%arg0: i32) -> (i32, i32) {
    %c0_i32 = arith.constant 0 : i32
    %c0_i32_0 = arith.constant 0 : i32
    %c0_i32_1 = arith.constant 0 : i32
    return %c0_i32, %c0_i32_0 : i32, i32
  }
  func.func @transform_15(%arg0: i32) -> (i32, i32) {
    %c0_i32 = arith.constant 0 : i32
    %c0_i32_0 = arith.constant 0 : i32
    return %arg0, %c0_i32 : i32, i32
  }
}

</mosaic_0001>

<llo_original>
// kernel: vae_forward.1
$region0: #{vae_forward.1}
  #allocation0 [shape = 'u32[]', space=smem, size = 0x4, offset = 0x4, fixed_abs, tag = 'smem constant byte address 0x4 - core index']
  #allocation1 [shape = 'u32[72,128]{1,0:T(1,128)}', space=vmem, size = 0x9000, scoped, tag = 'internal scratch']
  %s0 = inlined_call_operand.vmem [shape: bf16[128,64], index: 0, kind: input, shape index: {}]
  %s1 = inlined_call_operand.vmem [shape: f32[128,128], index: 1, kind: input, shape index: {}]
  %s2 = inlined_call_operand.hbm [shape: bf16[64,256], index: 2, kind: input, shape index: {}]
  %s3 = inlined_call_operand.vmem [shape: f32[1,256], index: 3, kind: input, shape index: {}]
  %s4 = inlined_call_operand.vmem [shape: bf16[256,128], index: 4, kind: input, shape index: {}]
  %s5 = inlined_call_operand.vmem [shape: f32[1,128], index: 5, kind: input, shape index: {}]
  %s6 = inlined_call_operand.vmem [shape: bf16[128,256], index: 6, kind: input, shape index: {}]
  %s7 = inlined_call_operand.vmem [shape: f32[1,256], index: 7, kind: input, shape index: {}]
  %s8 = inlined_call_operand.hbm [shape: bf16[128,128], index: 8, kind: input, shape index: {}]
  %s9 = inlined_call_operand.vmem [shape: f32[1,128], index: 9, kind: input, shape index: {}]
  %s10 = inlined_call_operand.vmem [shape: bf16[128,256], index: 10, kind: input, shape index: {}]
  %s11 = inlined_call_operand.vmem [shape: f32[1,256], index: 11, kind: input, shape index: {}]
  %s12 = inlined_call_operand.vmem [shape: bf16[256,128], index: 12, kind: input, shape index: {}]
  %s13 = inlined_call_operand.vmem [shape: f32[1,128], index: 13, kind: input, shape index: {}]
  %s14 = inlined_call_operand.hbm [shape: bf16[256,128], index: 14, kind: input, shape index: {}]
  %s15 = inlined_call_operand.vmem [shape: bf16[128,128], index: 15, kind: output, shape index: {}]
  %s16 = sld [smem:[#allocation0]]
  $region82: #{vae_forward.1} parent=0
    _
  %s18 = ssub.s32 1, %s16
  %s19 = scalar_select 0, %s18, %s16
  $region1: #{vae_forward.1} parent=0
    #allocation2 [shape = 'u8[32768]{0}', space=vmem, size = 0x8000, scoped, tag = 'input window, operand 2, single buffered']
    #allocation3 [shape = 's32[1]{0}', space=sflag, size = 0x4, scoped, tag = 'scoped memory for vae_forward.1']
    #allocation4 [shape = 'u8[32768]{0}', space=vmem, size = 0x8000, scoped, tag = 'input window, operand 8, single buffered']
    #allocation5 [shape = 's32[1]{0}', space=sflag, size = 0x4, scoped, tag = 'scoped memory for vae_forward.1']
    #allocation6 [shape = 'u8[65536]{0}', space=vmem, size = 0x10000, scoped, tag = 'input window, operand 14, single buffered']
    %20 = vsyncpa [#allocation3], 0
    %21 = vsyncpa [#allocation5], 0
    // Predicated region
    $region2: #{vae_forward.1} parent=1 // pred_check
      _
    $region3: #{vae_forward.1} parent=1 // pred_check_branch
      %23 = sbr.rel (0) target = $region5
    $region4: #{vae_forward.1} parent=1 // pred_region
      _
    $region5: #{vae_forward.1} parent=1 // pred_fallthru
      _
    // Predicated region
    $region6: #{vae_forward.1} parent=1 // pred_check
      _
    $region7: #{vae_forward.1} parent=1 // pred_check_branch
      %25 = sbr.rel (0) target = $region9
    $region8: #{vae_forward.1} parent=1 // pred_region
      _
    $region9: #{vae_forward.1} parent=1 // pred_fallthru
      _
    // Predicated region
    $region10: #{vae_forward.1} parent=1 // pred_check
      _
    $region11: #{vae_forward.1} parent=1 // pred_check_branch
      %27 = sbr.rel (0) target = $region13
    $region12: #{vae_forward.1} parent=1 // pred_region
      %29 = vsyncadd [#allocation3], 0
      %s30 = sshll.u32 %s2, 4
      %s31 = int_to_ptr.hbm [resolvable:$true] %s30
      %s32 = sshll.u32 [#allocation2], 4
      %s33 = int_to_ptr.vmem [resolvable:$true] %s32
      %38 = dma.hbm_to_vmem [thread:$0]  %s31, 1024, %s33, [#allocation3], 128, 128, 8
    $region13: #{vae_forward.1} parent=1 // pred_fallthru
      _
    // Predicated region
    $region14: #{vae_forward.1} parent=1 // pred_check
      _
    $region15: #{vae_forward.1} parent=1 // pred_check_branch
      %40 = sbr.rel (0) target = $region17
    $region16: #{vae_forward.1} parent=1 // pred_region
      _
    $region17: #{vae_forward.1} parent=1 // pred_fallthru
      _
    // Predicated region
    $region18: #{vae_forward.1} parent=1 // pred_check
      _
    $region19: #{vae_forward.1} parent=1 // pred_check_branch
      %42 = sbr.rel (0) target = $region21
    $region20: #{vae_forward.1} parent=1 // pred_region
      _
    $region21: #{vae_forward.1} parent=1 // pred_fallthru
      _
    // Predicated region
    $region22: #{vae_forward.1} parent=1 // pred_check
      _
    $region23: #{vae_forward.1} parent=1 // pred_check_branch
      %44 = sbr.rel (0) target = $region25
    $region24: #{vae_forward.1} parent=1 // pred_region
      _
    $region25: #{vae_forward.1} parent=1 // pred_fallthru
      _
    // Predicated region
    $region26: #{vae_forward.1} parent=1 // pred_check
      _
    $region27: #{vae_forward.1} parent=1 // pred_check_branch
      %46 = sbr.rel (0) target = $region29
    $region28: #{vae_forward.1} parent=1 // pred_region
      _
    $region29: #{vae_forward.1} parent=1 // pred_fallthru
      _
    // Predicated region
    $region30: #{vae_forward.1} parent=1 // pred_check
      _
    $region31: #{vae_forward.1} parent=1 // pred_check_branch
      %48 = sbr.rel (0) target = $region33
    $region32: #{vae_forward.1} parent=1 // pred_region
      _
    $region33: #{vae_forward.1} parent=1 // pred_fallthru
      _
    // Predicated region
    $region34: #{vae_forward.1} parent=1 // pred_check
      _
    $region35: #{vae_forward.1} parent=1 // pred_check_branch
      %50 = sbr.rel (0) target = $region37
    $region36: #{vae_forward.1} parent=1 // pred_region
      %52 = vsyncadd [#allocation5], 0
      %s53 = sshll.u32 %s8, 4
      %s54 = int_to_ptr.hbm [resolvable:$true] %s53
      %s55 = sshll.u32 [#allocation4], 4
      %s56 = int_to_ptr.vmem [resolvable:$true] %s55
      %61 = dma.hbm_to_vmem [thread:$0]  %s54, 1024, %s56, [#allocation5], 64, 64, 4
    $region37: #{vae_forward.1} parent=1 // pred_fallthru
      _
    // Predicated region
    $region38: #{vae_forward.1} parent=1 // pred_check
      _
    $region39: #{vae_forward.1} parent=1 // pred_check_branch
      %63 = sbr.rel (0) target = $region41
    $region40: #{vae_forward.1} parent=1 // pred_region
      _
    $region41: #{vae_forward.1} parent=1 // pred_fallthru
      _
    // Predicated region
    $region42: #{vae_forward.1} parent=1 // pred_check
      _
    $region43: #{vae_forward.1} parent=1 // pred_check_branch
      %65 = sbr.rel (0) target = $region45
    $region44: #{vae_forward.1} parent=1 // pred_region
      _
    $region45: #{vae_forward.1} parent=1 // pred_fallthru
      _
    // Predicated region
    $region46: #{vae_forward.1} parent=1 // pred_check
      _
    $region47: #{vae_forward.1} parent=1 // pred_check_branch
      %67 = sbr.rel (0) target = $region49
    $region48: #{vae_forward.1} parent=1 // pred_region
      _
    $region49: #{vae_forward.1} parent=1 // pred_fallthru
      _
    // Predicated region
    $region50: #{vae_forward.1} parent=1 // pred_check
      _
    $region51: #{vae_forward.1} parent=1 // pred_check_branch
      %69 = sbr.rel (0) target = $region53
    $region52: #{vae_forward.1} parent=1 // pred_region
      _
    $region53: #{vae_forward.1} parent=1 // pred_fallthru
      _
    // Predicated region
    $region54: #{vae_forward.1} parent=1 // pred_check
      _
    $region55: #{vae_forward.1} parent=1 // pred_check_branch
      %71 = sbr.rel (0) target = $region57
    $region56: #{vae_forward.1} parent=1 // pred_region
      _
    $region57: #{vae_forward.1} parent=1 // pred_fallthru
      _
    // Predicated region
    $region58: #{vae_forward.1} parent=1 // pred_check
      _
    $region59: #{vae_forward.1} parent=1 // pred_check_branch
      %73 = sbr.rel (0) target = $region61
    $region60: #{vae_forward.1} parent=1 // pred_region
      %75 = vsyncadd [#allocation5], 0
      %s76 = sshll.u32 %s14, 4
      %s77 = int_to_ptr.hbm [resolvable:$true] %s76
      %s78 = sshll.u32 [#allocation6], 4
      %s79 = int_to_ptr.vmem [resolvable:$true] %s78
      %84 = dma.hbm_to_vmem [thread:$0]  %s77, 2048, %s79, [#allocation5], 64, 64, 4
    $region61: #{vae_forward.1} parent=1 // pred_fallthru
      _
    // Predicated region
    $region62: #{vae_forward.1} parent=1 // pred_check
      _
    $region63: #{vae_forward.1} parent=1 // pred_check_branch
      %86 = sbr.rel (0) target = $region65
    $region64: #{vae_forward.1} parent=1 // pred_region
      %88 = dma.done [#allocation3], 1024
    $region65: #{vae_forward.1} parent=1 // pred_fallthru
      _
    // Predicated region
    $region66: #{vae_forward.1} parent=1 // pred_check
      _
    $region67: #{vae_forward.1} parent=1 // pred_check_branch
      %90 = sbr.rel (0) target = $region69
    $region68: #{vae_forward.1} parent=1 // pred_region
      %92 = dma.done [#allocation5], 1024
    $region69: #{vae_forward.1} parent=1 // pred_fallthru
      _
    // Predicated region
    $region70: #{vae_forward.1} parent=1 // pred_check
      _
    $region71: #{vae_forward.1} parent=1 // pred_check_branch
      %94 = sbr.rel (0) target = $region73
    $region72: #{vae_forward.1} parent=1 // pred_region
      %96 = dma.done [#allocation5], 2048
    $region73: #{vae_forward.1} parent=1 // pred_fallthru
      _
    %v98 = vld [vmem:[%s0] sm:$0xf]
    %v99 = vld [vmem:[%s0 + $0x4] sm:$0xf]
    %v100 = vld [vmem:[%s0 + $0x8] sm:$0xf]
    %v101 = vld [vmem:[%s0 + $0xc] sm:$0xf]
    %v102 = vld [vmem:[%s0 + $0x10] sm:$0xf]
    %v103 = vld [vmem:[%s0 + $0x14] sm:$0xf]
    %v104 = vld [vmem:[%s0 + $0x18] sm:$0xf]
    %v105 = vld [vmem:[%s0 + $0x1c] sm:$0xf]
    %v106 = vld [vmem:[%s0 + $0x20] sm:$0xf]
    %v107 = vld [vmem:[%s0 + $0x24] sm:$0xf]
    %v108 = vld [vmem:[%s0 + $0x28] sm:$0xf]
    %v109 = vld [vmem:[%s0 + $0x2c] sm:$0xf]
    %v110 = vld [vmem:[%s0 + $0x30] sm:$0xf]
    %v111 = vld [vmem:[%s0 + $0x34] sm:$0xf]
    %v112 = vld [vmem:[%s0 + $0x38] sm:$0xf]
    %v113 = vld [vmem:[%s0 + $0x3c] sm:$0xf]
    %v114 = vld [vmem:[#allocation2] sm:$0xff]
    %v115 = vld [vmem:[#allocation2 + $0x8] sm:$0xff]
    %v116 = vld [vmem:[#allocation2 + $0x10] sm:$0xff]
    %v117 = vld [vmem:[#allocation2 + $0x18] sm:$0xff]
    %v118 = vld [vmem:[#allocation2 + $0x20] sm:$0xff]
    %v119 = vld [vmem:[#allocation2 + $0x28] sm:$0xff]
    %v120 = vld [vmem:[#allocation2 + $0x30] sm:$0xff]
    %v121 = vld [vmem:[#allocation2 + $0x38] sm:$0xff]
    %v122 = vld [vmem:[%s3] sm:$0x3]
    %v124 = vperm.slane %v122, 0
    %v125 = vperm.slane %v122, 1
    %v144 = vunpack.c.l.b16 %v98
    %v145 = vunpack.c.l.b16 %v99
    %v146 = vunpack.c.l.b16 %v100
    %v147 = vunpack.c.l.b16 %v101
    %v148 = vunpack.c.l.b16 %v102
    %v149 = vunpack.c.l.b16 %v103
    %v150 = vunpack.c.l.b16 %v104
    %v151 = vunpack.c.l.b16 %v105
    %v152 = vunpack.c.l.b16 %v106
    %v153 = vunpack.c.l.b16 %v107
    %v154 = vunpack.c.l.b16 %v108
    %v155 = vunpack.c.l.b16 %v109
    %v156 = vunpack.c.l.b16 %v110
    %v157 = vunpack.c.l.b16 %v111
    %v158 = vunpack.c.l.b16 %v112
    %v159 = vunpack.c.l.b16 %v113
    %v160 = vpack.c.b16 %v145, %v144
    %v161 = vpack.c.b16 %v147, %v146
    %v162 = vpack.c.b16 %v149, %v148
    %v163 = vpack.c.b16 %v151, %v150
    %v164 = vpack.c.b16 %v153, %v152
    %v165 = vpack.c.b16 %v155, %v154
    %v166 = vpack.c.b16 %v157, %v156
    %v167 = vpack.c.b16 %v159, %v158
    %v176 = vunpack.c.l.b16 %v114
    %v177 = vunpack.c.h.b16 %v114
    %v178 = vunpack.c.l.b16 %v115
    %v179 = vunpack.c.h.b16 %v115
    %v180 = vunpack.c.l.b16 %v116
    %v181 = vunpack.c.h.b16 %v116
    %v182 = vunpack.c.l.b16 %v117
    %v183 = vunpack.c.h.b16 %v117
    %v184 = vunpack.c.l.b16 %v118
    %v185 = vunpack.c.h.b16 %v118
    %v186 = vunpack.c.l.b16 %v119
    %v187 = vunpack.c.h.b16 %v119
    %v188 = vunpack.c.l.b16 %v120
    %v189 = vunpack.c.h.b16 %v120
    %v190 = vunpack.c.l.b16 %v121
    %v191 = vunpack.c.h.b16 %v121
    %v192 = vpack.c.b16 %v178, %v176
    %v193 = vpack.c.b16 %v179, %v177
    %v194 = vpack.c.b16 %v182, %v180
    %v195 = vpack.c.b16 %v183, %v181
    %v196 = vpack.c.b16 %v186, %v184
    %v197 = vpack.c.b16 %v187, %v185
    %v198 = vpack.c.b16 %v190, %v188
    %v199 = vpack.c.b16 %v191, %v189
    %vm208 = vcmask 523264
    %v210 = vsel %vm208, %v160, 0
    %v213 = vsel %vm208, %v161, 0
    %v216 = vsel %vm208, %v162, 0
    %v219 = vsel %vm208, %v163, 0
    %v222 = vsel %vm208, %v164, 0
    %v225 = vsel %vm208, %v165, 0
    %v228 = vsel %vm208, %v166, 0
    %v231 = vsel %vm208, %v167, 0
    %233 = vmatpush.bf16.msra.mxu0 0
    %234 = vmatpush.bf16.msra.mxu0 0
    %235 = vmatpush.bf16.msra.mxu0 0
    %236 = vmatpush.bf16.msra.mxu0 0
    %237 = vmatpush.bf16.msra.mxu0 %v198
    %238 = vmatpush.bf16.msra.mxu0 %v196
    %239 = vmatpush.bf16.msra.mxu0 %v194
    %240 = vmatpush.bf16.msra.mxu0 %v192
    %241 = vmatmul.bf16.gmra.mxu0 %v210
    %v242 = vpop.f32.mrf.mxu0
    %v243 = vadd.f32 %v124, %v242
    %v244 = vpop.f32.mrf.mxu0
    %v245 = vadd.f32 %v124, %v244
    %246 = vmatmul.bf16.gmra.mxu0 %v213
    %v247 = vpop.f32.mrf.mxu0
    %v248 = vadd.f32 %v124, %v247
    %v249 = vpop.f32.mrf.mxu0
    %v250 = vadd.f32 %v124, %v249
    %251 = vmatmul.bf16.gmra.mxu0 %v216
    %v252 = vpop.f32.mrf.mxu0
    %v253 = vadd.f32 %v124, %v252
    %v254 = vpop.f32.mrf.mxu0
    %v255 = vadd.f32 %v124, %v254
    %256 = vmatmul.bf16.gmra.mxu0 %v219
    %v257 = vpop.f32.mrf.mxu0
    %v258 = vadd.f32 %v124, %v257
    %v259 = vpop.f32.mrf.mxu0
    %v260 = vadd.f32 %v124, %v259
    %261 = vmatmul.bf16.gmra.mxu0 %v222
    %v262 = vpop.f32.mrf.mxu0
    %v263 = vadd.f32 %v124, %v262
    %v264 = vpop.f32.mrf.mxu0
    %v265 = vadd.f32 %v124, %v264
    %266 = vmatmul.bf16.gmra.mxu0 %v225
    %v267 = vpop.f32.mrf.mxu0
    %v268 = vadd.f32 %v124, %v267
    %v269 = vpop.f32.mrf.mxu0
    %v270 = vadd.f32 %v124, %v269
    %271 = vmatmul.bf16.gmra.mxu0 %v228
    %v272 = vpop.f32.mrf.mxu0
    %v273 = vadd.f32 %v124, %v272
    %v274 = vpop.f32.mrf.mxu0
    %v275 = vadd.f32 %v124, %v274
    %276 = vmatmul.bf16.gmra.mxu0 %v231
    %v277 = vpop.f32.mrf.mxu0
    %v278 = vadd.f32 %v124, %v277
    %v279 = vpop.f32.mrf.mxu0
    %v280 = vadd.f32 %v124, %v279
    %281 = vdwg.mxu0
    %282 = vmatpush.bf16.msra.mxu0 0
    %283 = vmatpush.bf16.msra.mxu0 0
    %284 = vmatpush.bf16.msra.mxu0 0
    %285 = vmatpush.bf16.msra.mxu0 0
    %286 = vmatpush.bf16.msra.mxu0 %v199
    %287 = vmatpush.bf16.msra.mxu0 %v197
    %288 = vmatpush.bf16.msra.mxu0 %v195
    %289 = vmatpush.bf16.msra.mxu0 %v193
    %290 = vmatmul.bf16.gmra.mxu0 %v210
    %v291 = vpop.f32.mrf.mxu0
    %v292 = vadd.f32 %v125, %v291
    %v293 = vpop.f32.mrf.mxu0
    %v294 = vadd.f32 %v125, %v293
    %295 = vmatmul.bf16.gmra.mxu0 %v213
    %v296 = vpop.f32.mrf.mxu0
    %v297 = vadd.f32 %v125, %v296
    %v298 = vpop.f32.mrf.mxu0
    %v299 = vadd.f32 %v125, %v298
    %300 = vmatmul.bf16.gmra.mxu0 %v216
    %v301 = vpop.f32.mrf.mxu0
    %v302 = vadd.f32 %v125, %v301
    %v303 = vpop.f32.mrf.mxu0
    %v304 = vadd.f32 %v125, %v303
    %305 = vmatmul.bf16.gmra.mxu0 %v219
    %v306 = vpop.f32.mrf.mxu0
    %v307 = vadd.f32 %v125, %v306
    %v308 = vpop.f32.mrf.mxu0
    %v309 = vadd.f32 %v125, %v308
    %310 = vmatmul.bf16.gmra.mxu0 %v222
    %v311 = vpop.f32.mrf.mxu0
    %v312 = vadd.f32 %v125, %v311
    %v313 = vpop.f32.mrf.mxu0
    %v314 = vadd.f32 %v125, %v313
    %315 = vmatmul.bf16.gmra.mxu0 %v225
    %v316 = vpop.f32.mrf.mxu0
    %v317 = vadd.f32 %v125, %v316
    %v318 = vpop.f32.mrf.mxu0
    %v319 = vadd.f32 %v125, %v318
    %320 = vmatmul.bf16.gmra.mxu0 %v228
    %v321 = vpop.f32.mrf.mxu0
    %v322 = vadd.f32 %v125, %v321
    %v323 = vpop.f32.mrf.mxu0
    %v324 = vadd.f32 %v125, %v323
    %325 = vmatmul.bf16.gmra.mxu0 %v231
    %v326 = vpop.f32.mrf.mxu0
    %v327 = vadd.f32 %v125, %v326
    %v328 = vpop.f32.mrf.mxu0
    %v329 = vadd.f32 %v125, %v328
    %330 = vdwg.mxu0
    %v331 = vmax.f32 %v243, 0.0
    %v332 = vmax.f32 %v292, 0.0
    %v333 = vmax.f32 %v245, 0.0
    %v334 = vmax.f32 %v294, 0.0
    %v335 = vmax.f32 %v248, 0.0
    %v336 = vmax.f32 %v297, 0.0
    %v337 = vmax.f32 %v250, 0.0
    %v338 = vmax.f32 %v299, 0.0
    %v339 = vmax.f32 %v253, 0.0
    %v340 = vmax.f32 %v302, 0.0
    %v341 = vmax.f32 %v255, 0.0
    %v342 = vmax.f32 %v304, 0.0
    %v343 = vmax.f32 %v258, 0.0
    %v344 = vmax.f32 %v307, 0.0
    %v345 = vmax.f32 %v260, 0.0
    %v346 = vmax.f32 %v309, 0.0
    %v347 = vmax.f32 %v263, 0.0
    %v348 = vmax.f32 %v312, 0.0
    %v349 = vmax.f32 %v265, 0.0
    %v350 = vmax.f32 %v314, 0.0
    %v351 = vmax.f32 %v268, 0.0
    %v352 = vmax.f32 %v317, 0.0
    %v353 = vmax.f32 %v270, 0.0
    %v354 = vmax.f32 %v319, 0.0
    %v355 = vmax.f32 %v273, 0.0
    %v356 = vmax.f32 %v322, 0.0
    %v357 = vmax.f32 %v275, 0.0
    %v358 = vmax.f32 %v324, 0.0
    %v359 = vmax.f32 %v278, 0.0
    %v360 = vmax.f32 %v327, 0.0
    %v361 = vmax.f32 %v280, 0.0
    %v362 = vmax.f32 %v329, 0.0
    %v363 = vpack.c.bf16 %v333, %v331
    %v364 = vpack.c.bf16 %v334, %v332
    %v365 = vpack.c.bf16 %v337, %v335
    %v366 = vpack.c.bf16 %v338, %v336
    %v367 = vpack.c.bf16 %v341, %v339
    %v368 = vpack.c.bf16 %v342, %v340
    %v369 = vpack.c.bf16 %v345, %v343
    %v370 = vpack.c.bf16 %v346, %v344
    %v371 = vpack.c.bf16 %v349, %v347
    %v372 = vpack.c.bf16 %v350, %v348
    %v373 = vpack.c.bf16 %v353, %v351
    %v374 = vpack.c.bf16 %v354, %v352
    %v375 = vpack.c.bf16 %v357, %v355
    %v376 = vpack.c.bf16 %v358, %v356
    %v377 = vpack.c.bf16 %v361, %v359
    %v378 = vpack.c.bf16 %v362, %v360
    %v379 = vld [vmem:[%s4] sm:$0xf]
    %v380 = vld [vmem:[%s4 + $0x4] sm:$0xf]
    %v381 = vld [vmem:[%s4 + $0x8] sm:$0xf]
    %v382 = vld [vmem:[%s4 + $0xc] sm:$0xf]
    %v383 = vld [vmem:[%s4 + $0x10] sm:$0xf]
    %v384 = vld [vmem:[%s4 + $0x14] sm:$0xf]
    %v385 = vld [vmem:[%s4 + $0x18] sm:$0xf]
    %v386 = vld [vmem:[%s4 + $0x1c] sm:$0xf]
    %v387 = vld [vmem:[%s4 + $0x20] sm:$0xf]
    %v388 = vld [vmem:[%s4 + $0x24] sm:$0xf]
    %v389 = vld [vmem:[%s4 + $0x28] sm:$0xf]
    %v390 = vld [vmem:[%s4 + $0x2c] sm:$0xf]
    %v391 = vld [vmem:[%s4 + $0x30] sm:$0xf]
    %v392 = vld [vmem:[%s4 + $0x34] sm:$0xf]
    %v393 = vld [vmem:[%s4 + $0x38] sm:$0xf]
    %v394 = vld [vmem:[%s4 + $0x3c] sm:$0xf]
    %v395 = vld [vmem:[%s4 + $0x40] sm:$0xf]
    %v396 = vld [vmem:[%s4 + $0x44] sm:$0xf]
    %v397 = vld [vmem:[%s4 + $0x48] sm:$0xf]
    %v398 = vld [vmem:[%s4 + $0x4c] sm:$0xf]
    %v399 = vld [vmem:[%s4 + $0x50] sm:$0xf]
    %v400 = vld [vmem:[%s4 + $0x54] sm:$0xf]
    %v401 = vld [vmem:[%s4 + $0x58] sm:$0xf]
    %v402 = vld [vmem:[%s4 + $0x5c] sm:$0xf]
    %v403 = vld [vmem:[%s4 + $0x60] sm:$0xf]
    %v404 = vld [vmem:[%s4 + $0x64] sm:$0xf]
    %v405 = vld [vmem:[%s4 + $0x68] sm:$0xf]
    %v406 = vld [vmem:[%s4 + $0x6c] sm:$0xf]
    %v407 = vld [vmem:[%s4 + $0x70] sm:$0xf]
    %v408 = vld [vmem:[%s4 + $0x74] sm:$0xf]
    %v409 = vld [vmem:[%s4 + $0x78] sm:$0xf]
    %v410 = vld [vmem:[%s4 + $0x7c] sm:$0xf]
    %v411 = vld [vmem:[%s5] sm:$0x1]
    %v413 = vperm.slane %v411, 0
    %v447 = vunpack.c.l.b16 %v379
    %v448 = vunpack.c.l.b16 %v380
    %v449 = vunpack.c.l.b16 %v381
    %v450 = vunpack.c.l.b16 %v382
    %v451 = vunpack.c.l.b16 %v383
    %v452 = vunpack.c.l.b16 %v384
    %v453 = vunpack.c.l.b16 %v385
    %v454 = vunpack.c.l.b16 %v386
    %v455 = vunpack.c.l.b16 %v387
    %v456 = vunpack.c.l.b16 %v388
    %v457 = vunpack.c.l.b16 %v389
    %v458 = vunpack.c.l.b16 %v390
    %v459 = vunpack.c.l.b16 %v391
    %v460 = vunpack.c.l.b16 %v392
    %v461 = vunpack.c.l.b16 %v393
    %v462 = vunpack.c.l.b16 %v394
    %v463 = vunpack.c.l.b16 %v395
    %v464 = vunpack.c.l.b16 %v396
    %v465 = vunpack.c.l.b16 %v397
    %v466 = vunpack.c.l.b16 %v398
    %v467 = vunpack.c.l.b16 %v399
    %v468 = vunpack.c.l.b16 %v400
    %v469 = vunpack.c.l.b16 %v401
    %v470 = vunpack.c.l.b16 %v402
    %v471 = vunpack.c.l.b16 %v403
    %v472 = vunpack.c.l.b16 %v404
    %v473 = vunpack.c.l.b16 %v405
    %v474 = vunpack.c.l.b16 %v406
    %v475 = vunpack.c.l.b16 %v407
    %v476 = vunpack.c.l.b16 %v408
    %v477 = vunpack.c.l.b16 %v409
    %v478 = vunpack.c.l.b16 %v410
    %v479 = vpack.c.b16 %v448, %v447
    %v480 = vpack.c.b16 %v450, %v449
    %v481 = vpack.c.b16 %v452, %v451
    %v482 = vpack.c.b16 %v454, %v453
    %v483 = vpack.c.b16 %v456, %v455
    %v484 = vpack.c.b16 %v458, %v457
    %v485 = vpack.c.b16 %v460, %v459
    %v486 = vpack.c.b16 %v462, %v461
    %v487 = vpack.c.b16 %v464, %v463
    %v488 = vpack.c.b16 %v466, %v465
    %v489 = vpack.c.b16 %v468, %v467
    %v490 = vpack.c.b16 %v470, %v469
    %v491 = vpack.c.b16 %v472, %v471
    %v492 = vpack.c.b16 %v474, %v473
    %v493 = vpack.c.b16 %v476, %v475
    %v494 = vpack.c.b16 %v478, %v477
    %511 = vmatpush.bf16.msra.mxu0 %v486
    %512 = vmatpush.bf16.msra.mxu0 %v485
    %513 = vmatpush.bf16.msra.mxu0 %v484
    %514 = vmatpush.bf16.msra.mxu0 %v483
    %515 = vmatpush.bf16.msra.mxu0 %v482
    %516 = vmatpush.bf16.msra.mxu0 %v481
    %517 = vmatpush.bf16.msra.mxu0 %v480
    %518 = vmatpush.bf16.msra.mxu0 %v479
    %519 = vmatmul.bf16.gmra.mxu0 %v363
    %v520 = vpop.f32.mrf.mxu0
    %v521 = vadd.f32 %v413, %v520
    %v522 = vpop.f32.mrf.mxu0
    %v523 = vadd.f32 %v413, %v522
    %524 = vmatmul.bf16.gmra.mxu0 %v365
    %v525 = vpop.f32.mrf.mxu0
    %v526 = vadd.f32 %v413, %v525
    %v527 = vpop.f32.mrf.mxu0
    %v528 = vadd.f32 %v413, %v527
    %529 = vmatmul.bf16.gmra.mxu0 %v367
    %v530 = vpop.f32.mrf.mxu0
    %v531 = vadd.f32 %v413, %v530
    %v532 = vpop.f32.mrf.mxu0
    %v533 = vadd.f32 %v413, %v532
    %534 = vmatmul.bf16.gmra.mxu0 %v369
    %v535 = vpop.f32.mrf.mxu0
    %v536 = vadd.f32 %v413, %v535
    %v537 = vpop.f32.mrf.mxu0
    %v538 = vadd.f32 %v413, %v537
    %539 = vmatmul.bf16.gmra.mxu0 %v371
    %v540 = vpop.f32.mrf.mxu0
    %v541 = vadd.f32 %v413, %v540
    %v542 = vpop.f32.mrf.mxu0
    %v543 = vadd.f32 %v413, %v542
    %544 = vmatmul.bf16.gmra.mxu0 %v373
    %v545 = vpop.f32.mrf.mxu0
    %v546 = vadd.f32 %v413, %v545
    %v547 = vpop.f32.mrf.mxu0
    %v548 = vadd.f32 %v413, %v547
    %549 = vmatmul.bf16.gmra.mxu0 %v375
    %v550 = vpop.f32.mrf.mxu0
    %v551 = vadd.f32 %v413, %v550
    %v552 = vpop.f32.mrf.mxu0
    %v553 = vadd.f32 %v413, %v552
    %554 = vmatmul.bf16.gmra.mxu0 %v377
    %v555 = vpop.f32.mrf.mxu0
    %v556 = vadd.f32 %v413, %v555
    %v557 = vpop.f32.mrf.mxu0
    %v558 = vadd.f32 %v413, %v557
    %559 = vdwg.mxu0
    %560 = vmatpush.bf16.msra.mxu0 %v494
    %561 = vmatpush.bf16.msra.mxu0 %v493
    %562 = vmatpush.bf16.msra.mxu0 %v492
    %563 = vmatpush.bf16.msra.mxu0 %v491
    %564 = vmatpush.bf16.msra.mxu0 %v490
    %565 = vmatpush.bf16.msra.mxu0 %v489
    %566 = vmatpush.bf16.msra.mxu0 %v488
    %567 = vmatpush.bf16.msra.mxu0 %v487
    %568 = vmatmul.bf16.gmra.mxu0 %v364
    %v569 = vpop.f32.mrf.mxu0
    %v570 = vadd.f32 %v521, %v569
    %v571 = vpop.f32.mrf.mxu0
    %v572 = vadd.f32 %v523, %v571
    %573 = vmatmul.bf16.gmra.mxu0 %v366
    %v574 = vpop.f32.mrf.mxu0
    %v575 = vadd.f32 %v526, %v574
    %v576 = vpop.f32.mrf.mxu0
    %v577 = vadd.f32 %v528, %v576
    %578 = vmatmul.bf16.gmra.mxu0 %v368
    %v579 = vpop.f32.mrf.mxu0
    %v580 = vadd.f32 %v531, %v579
    %v581 = vpop.f32.mrf.mxu0
    %v582 = vadd.f32 %v533, %v581
    %583 = vmatmul.bf16.gmra.mxu0 %v370
    %v584 = vpop.f32.mrf.mxu0
    %v585 = vadd.f32 %v536, %v584
    %v586 = vpop.f32.mrf.mxu0
    %v587 = vadd.f32 %v538, %v586
    %588 = vmatmul.bf16.gmra.mxu0 %v372
    %v589 = vpop.f32.mrf.mxu0
    %v590 = vadd.f32 %v541, %v589
    %v591 = vpop.f32.mrf.mxu0
    %v592 = vadd.f32 %v543, %v591
    %593 = vmatmul.bf16.gmra.mxu0 %v374
    %v594 = vpop.f32.mrf.mxu0
    %v595 = vadd.f32 %v546, %v594
    %v596 = vpop.f32.mrf.mxu0
    %v597 = vadd.f32 %v548, %v596
    %598 = vmatmul.bf16.gmra.mxu0 %v376
    %v599 = vpop.f32.mrf.mxu0
    %v600 = vadd.f32 %v551, %v599
    %v601 = vpop.f32.mrf.mxu0
    %v602 = vadd.f32 %v553, %v601
    %603 = vmatmul.bf16.gmra.mxu0 %v378
    %v604 = vpop.f32.mrf.mxu0
    %v605 = vadd.f32 %v556, %v604
    %v606 = vpop.f32.mrf.mxu0
    %v607 = vadd.f32 %v558, %v606
    %608 = vdwg.mxu0
    %v609 = vmax.f32 %v570, 0.0
    %v610 = vmax.f32 %v572, 0.0
    %v611 = vmax.f32 %v575, 0.0
    %v612 = vmax.f32 %v577, 0.0
    %v613 = vmax.f32 %v580, 0.0
    %v614 = vmax.f32 %v582, 0.0
    %v615 = vmax.f32 %v585, 0.0
    %v616 = vmax.f32 %v587, 0.0
    %v617 = vmax.f32 %v590, 0.0
    %v618 = vmax.f32 %v592, 0.0
    %v619 = vmax.f32 %v595, 0.0
    %v620 = vmax.f32 %v597, 0.0
    %v621 = vmax.f32 %v600, 0.0
    %v622 = vmax.f32 %v602, 0.0
    %v623 = vmax.f32 %v605, 0.0
    %v624 = vmax.f32 %v607, 0.0
    %v625 = vpack.c.bf16 %v610, %v609
    %v626 = vpack.c.bf16 %v612, %v611
    %v627 = vpack.c.bf16 %v614, %v613
    %v628 = vpack.c.bf16 %v616, %v615
    %v629 = vpack.c.bf16 %v618, %v617
    %v630 = vpack.c.bf16 %v620, %v619
    %v631 = vpack.c.bf16 %v622, %v621
    %v632 = vpack.c.bf16 %v624, %v623
    %v633 = vld [vmem:[%s6] sm:$0xff]
    %v634 = vld [vmem:[%s6 + $0x8] sm:$0xff]
    %v635 = vld [vmem:[%s6 + $0x10] sm:$0xff]
    %v636 = vld [vmem:[%s6 + $0x18] sm:$0xff]
    %v637 = vld [vmem:[%s6 + $0x20] sm:$0xff]
    %v638 = vld [vmem:[%s6 + $0x28] sm:$0xff]
    %v639 = vld [vmem:[%s6 + $0x30] sm:$0xff]
    %v640 = vld [vmem:[%s6 + $0x38] sm:$0xff]
    %v641 = vld [vmem:[%s6 + $0x40] sm:$0xff]
    %v642 = vld [vmem:[%s6 + $0x48] sm:$0xff]
    %v643 = vld [vmem:[%s6 + $0x50] sm:$0xff]
    %v644 = vld [vmem:[%s6 + $0x58] sm:$0xff]
    %v645 = vld [vmem:[%s6 + $0x60] sm:$0xff]
    %v646 = vld [vmem:[%s6 + $0x68] sm:$0xff]
    %v647 = vld [vmem:[%s6 + $0x70] sm:$0xff]
    %v648 = vld [vmem:[%s6 + $0x78] sm:$0xff]
    %v649 = vld [vmem:[%s7] sm:$0x3]
    %v651 = vperm.slane %v649, 0
    %v652 = vperm.slane %v649, 1
    %v671 = vunpack.c.l.b16 %v633
    %v672 = vunpack.c.h.b16 %v633
    %v673 = vunpack.c.l.b16 %v634
    %v674 = vunpack.c.h.b16 %v634
    %v675 = vunpack.c.l.b16 %v635
    %v676 = vunpack.c.h.b16 %v635
    %v677 = vunpack.c.l.b16 %v636
    %v678 = vunpack.c.h.b16 %v636
    %v679 = vunpack.c.l.b16 %v637
    %v680 = vunpack.c.h.b16 %v637
    %v681 = vunpack.c.l.b16 %v638
    %v682 = vunpack.c.h.b16 %v638
    %v683 = vunpack.c.l.b16 %v639
    %v684 = vunpack.c.h.b16 %v639
    %v685 = vunpack.c.l.b16 %v640
    %v686 = vunpack.c.h.b16 %v640
    %v687 = vunpack.c.l.b16 %v641
    %v688 = vunpack.c.h.b16 %v641
    %v689 = vunpack.c.l.b16 %v642
    %v690 = vunpack.c.h.b16 %v642
    %v691 = vunpack.c.l.b16 %v643
    %v692 = vunpack.c.h.b16 %v643
    %v693 = vunpack.c.l.b16 %v644
    %v694 = vunpack.c.h.b16 %v644
    %v695 = vunpack.c.l.b16 %v645
    %v696 = vunpack.c.h.b16 %v645
    %v697 = vunpack.c.l.b16 %v646
    %v698 = vunpack.c.h.b16 %v646
    %v699 = vunpack.c.l.b16 %v647
    %v700 = vunpack.c.h.b16 %v647
    %v701 = vunpack.c.l.b16 %v648
    %v702 = vunpack.c.h.b16 %v648
    %v703 = vpack.c.b16 %v673, %v671
    %v704 = vpack.c.b16 %v674, %v672
    %v705 = vpack.c.b16 %v677, %v675
    %v706 = vpack.c.b16 %v678, %v676
    %v707 = vpack.c.b16 %v681, %v679
    %v708 = vpack.c.b16 %v682, %v680
    %v709 = vpack.c.b16 %v685, %v683
    %v710 = vpack.c.b16 %v686, %v684
    %v711 = vpack.c.b16 %v689, %v687
    %v712 = vpack.c.b16 %v690, %v688
    %v713 = vpack.c.b16 %v693, %v691
    %v714 = vpack.c.b16 %v694, %v692
    %v715 = vpack.c.b16 %v697, %v695
    %v716 = vpack.c.b16 %v698, %v696
    %v717 = vpack.c.b16 %v701, %v699
    %v718 = vpack.c.b16 %v702, %v700
    %735 = vmatpush.bf16.msra.mxu0 %v717
    %736 = vmatpush.bf16.msra.mxu0 %v715
    %737 = vmatpush.bf16.msra.mxu0 %v713
    %738 = vmatpush.bf16.msra.mxu0 %v711
    %739 = vmatpush.bf16.msra.mxu0 %v709
    %740 = vmatpush.bf16.msra.mxu0 %v707
    %741 = vmatpush.bf16.msra.mxu0 %v705
    %742 = vmatpush.bf16.msra.mxu0 %v703
    %743 = vmatmul.bf16.gmra.mxu0 %v625
    %v744 = vpop.f32.mrf.mxu0
    %v745 = vadd.f32 %v651, %v744
    %v746 = vpop.f32.mrf.mxu0
    %v747 = vadd.f32 %v651, %v746
    %748 = vmatmul.bf16.gmra.mxu0 %v626
    %v749 = vpop.f32.mrf.mxu0
    %v750 = vadd.f32 %v651, %v749
    %v751 = vpop.f32.mrf.mxu0
    %v752 = vadd.f32 %v651, %v751
    %753 = vmatmul.bf16.gmra.mxu0 %v627
    %v754 = vpop.f32.mrf.mxu0
    %v755 = vadd.f32 %v651, %v754
    %v756 = vpop.f32.mrf.mxu0
    %v757 = vadd.f32 %v651, %v756
    %758 = vmatmul.bf16.gmra.mxu0 %v628
    %v759 = vpop.f32.mrf.mxu0
    %v760 = vadd.f32 %v651, %v759
    %v761 = vpop.f32.mrf.mxu0
    %v762 = vadd.f32 %v651, %v761
    %763 = vmatmul.bf16.gmra.mxu0 %v629
    %v764 = vpop.f32.mrf.mxu0
    %v765 = vadd.f32 %v651, %v764
    %v766 = vpop.f32.mrf.mxu0
    %v767 = vadd.f32 %v651, %v766
    %768 = vmatmul.bf16.gmra.mxu0 %v630
    %v769 = vpop.f32.mrf.mxu0
    %v770 = vadd.f32 %v651, %v769
    %v771 = vpop.f32.mrf.mxu0
    %v772 = vadd.f32 %v651, %v771
    %773 = vmatmul.bf16.gmra.mxu0 %v631
    %v774 = vpop.f32.mrf.mxu0
    %v775 = vadd.f32 %v651, %v774
    %v776 = vpop.f32.mrf.mxu0
    %v777 = vadd.f32 %v651, %v776
    %778 = vmatmul.bf16.gmra.mxu0 %v632
    %v779 = vpop.f32.mrf.mxu0
    %v780 = vadd.f32 %v651, %v779
    %v781 = vpop.f32.mrf.mxu0
    %v782 = vadd.f32 %v651, %v781
    %783 = vdwg.mxu0
    %784 = vmatpush.bf16.msra.mxu0 %v718
    %785 = vmatpush.bf16.msra.mxu0 %v716
    %786 = vmatpush.bf16.msra.mxu0 %v714
    %787 = vmatpush.bf16.msra.mxu0 %v712
    %788 = vmatpush.bf16.msra.mxu0 %v710
    %789 = vmatpush.bf16.msra.mxu0 %v708
    %790 = vmatpush.bf16.msra.mxu0 %v706
    %791 = vmatpush.bf16.msra.mxu0 %v704
    %792 = vmatmul.bf16.gmra.mxu0 %v625
    %v793 = vpop.f32.mrf.mxu0
    %v794 = vadd.f32 %v652, %v793
    %v795 = vpop.f32.mrf.mxu0
    %v796 = vadd.f32 %v652, %v795
    %797 = vmatmul.bf16.gmra.mxu0 %v626
    %v798 = vpop.f32.mrf.mxu0
    %v799 = vadd.f32 %v652, %v798
    %v800 = vpop.f32.mrf.mxu0
    %v801 = vadd.f32 %v652, %v800
    %802 = vmatmul.bf16.gmra.mxu0 %v627
    %v803 = vpop.f32.mrf.mxu0
    %v804 = vadd.f32 %v652, %v803
    %v805 = vpop.f32.mrf.mxu0
    %v806 = vadd.f32 %v652, %v805
    %807 = vmatmul.bf16.gmra.mxu0 %v628
    %v808 = vpop.f32.mrf.mxu0
    %v809 = vadd.f32 %v652, %v808
    %v810 = vpop.f32.mrf.mxu0
    %v811 = vadd.f32 %v652, %v810
    %812 = vmatmul.bf16.gmra.mxu0 %v629
    %v813 = vpop.f32.mrf.mxu0
    %v814 = vadd.f32 %v652, %v813
    %v815 = vpop.f32.mrf.mxu0
    %v816 = vadd.f32 %v652, %v815
    %817 = vmatmul.bf16.gmra.mxu0 %v630
    %v818 = vpop.f32.mrf.mxu0
    %v819 = vadd.f32 %v652, %v818
    %v820 = vpop.f32.mrf.mxu0
    %v821 = vadd.f32 %v652, %v820
    %822 = vmatmul.bf16.gmra.mxu0 %v631
    %v823 = vpop.f32.mrf.mxu0
    %v824 = vadd.f32 %v652, %v823
    %v825 = vpop.f32.mrf.mxu0
    %v826 = vadd.f32 %v652, %v825
    %827 = vmatmul.bf16.gmra.mxu0 %v632
    %v828 = vpop.f32.mrf.mxu0
    %v829 = vadd.f32 %v652, %v828
    %v830 = vpop.f32.mrf.mxu0
    %v831 = vadd.f32 %v652, %v830
    %832 = vdwg.mxu0
    %v833 = vtanh.pop %v745
    %v834 = vtanh.pop %v794
    %v835 = vtanh.pop %v747
    %v836 = vtanh.pop %v796
    %v837 = vtanh.pop %v750
    %v838 = vtanh.pop %v799
    %v839 = vtanh.pop %v752
    %v840 = vtanh.pop %v801
    %v841 = vtanh.pop %v755
    %v842 = vtanh.pop %v804
    %v843 = vtanh.pop %v757
    %v844 = vtanh.pop %v806
    %v845 = vtanh.pop %v760
    %v846 = vtanh.pop %v809
    %v847 = vtanh.pop %v762
    %v848 = vtanh.pop %v811
    %v849 = vtanh.pop %v765
    %v850 = vtanh.pop %v814
    %v851 = vtanh.pop %v767
    %v852 = vtanh.pop %v816
    %v853 = vtanh.pop %v770
    %v854 = vtanh.pop %v819
    %v855 = vtanh.pop %v772
    %v856 = vtanh.pop %v821
    %v857 = vtanh.pop %v775
    %v858 = vtanh.pop %v824
    %v859 = vtanh.pop %v777
    %v860 = vtanh.pop %v826
    %v861 = vtanh.pop %v780
    %v862 = vtanh.pop %v829
    %v863 = vtanh.pop %v782
    %v864 = vtanh.pop %v831
    %v865 = vld [vmem:[%s1] sm:$0xff]
    %v866 = vld [vmem:[%s1 + $0x8] sm:$0xff]
    %v867 = vld [vmem:[%s1 + $0x10] sm:$0xff]
    %v868 = vld [vmem:[%s1 + $0x18] sm:$0xff]
    %v869 = vld [vmem:[%s1 + $0x20] sm:$0xff]
    %v870 = vld [vmem:[%s1 + $0x28] sm:$0xff]
    %v871 = vld [vmem:[%s1 + $0x30] sm:$0xff]
    %v872 = vld [vmem:[%s1 + $0x38] sm:$0xff]
    %v873 = vld [vmem:[%s1 + $0x40] sm:$0xff]
    %v874 = vld [vmem:[%s1 + $0x48] sm:$0xff]
    %v875 = vld [vmem:[%s1 + $0x50] sm:$0xff]
    %v876 = vld [vmem:[%s1 + $0x58] sm:$0xff]
    %v877 = vld [vmem:[%s1 + $0x60] sm:$0xff]
    %v878 = vld [vmem:[%s1 + $0x68] sm:$0xff]
    %v879 = vld [vmem:[%s1 + $0x70] sm:$0xff]
    %v880 = vld [vmem:[%s1 + $0x78] sm:$0xff]
    %v881 = vmul.f32 %v834, 0.5
    %v882 = vmul.f32 %v836, 0.5
    %v883 = vmul.f32 %v838, 0.5
    %v884 = vmul.f32 %v840, 0.5
    %v885 = vmul.f32 %v842, 0.5
    %v886 = vmul.f32 %v844, 0.5
    %v887 = vmul.f32 %v846, 0.5
    %v888 = vmul.f32 %v848, 0.5
    %v889 = vmul.f32 %v850, 0.5
    %v890 = vmul.f32 %v852, 0.5
    %v891 = vmul.f32 %v854, 0.5
    %v892 = vmul.f32 %v856, 0.5
    %v893 = vmul.f32 %v858, 0.5
    %v894 = vmul.f32 %v860, 0.5
    %v895 = vmul.f32 %v862, 0.5
    %v896 = vmul.f32 %v864, 0.5
    %v897 = vmul.f32 %v881, 1.442695
    %v898 = vpow.pop %v897
    %v899 = vmul.f32 %v882, 1.442695
    %v900 = vpow.pop %v899
    %v901 = vmul.f32 %v883, 1.442695
    %v902 = vpow.pop %v901
    %v903 = vmul.f32 %v884, 1.442695
    %v904 = vpow.pop %v903
    %v905 = vmul.f32 %v885, 1.442695
    %v906 = vpow.pop %v905
    %v907 = vmul.f32 %v886, 1.442695
    %v908 = vpow.pop %v907
    %v909 = vmul.f32 %v887, 1.442695
    %v910 = vpow.pop %v909
    %v911 = vmul.f32 %v888, 1.442695
    %v912 = vpow.pop %v911
    %v913 = vmul.f32 %v889, 1.442695
    %v914 = vpow.pop %v913
    %v915 = vmul.f32 %v890, 1.442695
    %v916 = vpow.pop %v915
    %v917 = vmul.f32 %v891, 1.442695
    %v918 = vpow.pop %v917
    %v919 = vmul.f32 %v892, 1.442695
    %v920 = vpow.pop %v919
    %v921 = vmul.f32 %v893, 1.442695
    %v922 = vpow.pop %v921
    %v923 = vmul.f32 %v894, 1.442695
    %v924 = vpow.pop %v923
    %v925 = vmul.f32 %v895, 1.442695
    %v926 = vpow.pop %v925
    %v927 = vmul.f32 %v896, 1.442695
    %v928 = vpow.pop %v927
    %v929 = vmul.f32 %v865, %v898
    %v930 = vmul.f32 %v866, %v900
    %v931 = vmul.f32 %v867, %v902
    %v932 = vmul.f32 %v868, %v904
    %v933 = vmul.f32 %v869, %v906
    %v934 = vmul.f32 %v870, %v908
    %v935 = vmul.f32 %v871, %v910
    %v936 = vmul.f32 %v872, %v912
    %v937 = vmul.f32 %v873, %v914
    %v938 = vmul.f32 %v874, %v916
    %v939 = vmul.f32 %v875, %v918
    %v940 = vmul.f32 %v876, %v920
    %v941 = vmul.f32 %v877, %v922
    %v942 = vmul.f32 %v878, %v924
    %v943 = vmul.f32 %v879, %v926
    %v944 = vmul.f32 %v880, %v928
    %v945 = vadd.f32 %v833, %v929
    %v946 = vadd.f32 %v835, %v930
    %v947 = vadd.f32 %v837, %v931
    %v948 = vadd.f32 %v839, %v932
    %v949 = vadd.f32 %v841, %v933
    %v950 = vadd.f32 %v843, %v934
    %v951 = vadd.f32 %v845, %v935
    %v952 = vadd.f32 %v847, %v936
    %v953 = vadd.f32 %v849, %v937
    %v954 = vadd.f32 %v851, %v938
    %v955 = vadd.f32 %v853, %v939
    %v956 = vadd.f32 %v855, %v940
    %v957 = vadd.f32 %v857, %v941
    %v958 = vadd.f32 %v859, %v942
    %v959 = vadd.f32 %v861, %v943
    %v960 = vadd.f32 %v863, %v944
    %v961 = vpack.c.bf16 %v946, %v945
    %v962 = vpack.c.bf16 %v948, %v947
    %v963 = vpack.c.bf16 %v950, %v949
    %v964 = vpack.c.bf16 %v952, %v951
    %v965 = vpack.c.bf16 %v954, %v953
    %v966 = vpack.c.bf16 %v956, %v955
    %v967 = vpack.c.bf16 %v958, %v957
    %v968 = vpack.c.bf16 %v960, %v959
    %v969 = vld [vmem:[#allocation4] sm:$0xf]
    %v970 = vld [vmem:[#allocation4 + $0x4] sm:$0xf]
    %v971 = vld [vmem:[#allocation4 + $0x8] sm:$0xf]
    %v972 = vld [vmem:[#allocation4 + $0xc] sm:$0xf]
    %v973 = vld [vmem:[#allocation4 + $0x10] sm:$0xf]
    %v974 = vld [vmem:[#allocation4 + $0x14] sm:$0xf]
    %v975 = vld [vmem:[#allocation4 + $0x18] sm:$0xf]
    %v976 = vld [vmem:[#allocation4 + $0x1c] sm:$0xf]
    %v977 = vld [vmem:[#allocation4 + $0x20] sm:$0xf]
    %v978 = vld [vmem:[#allocation4 + $0x24] sm:$0xf]
    %v979 = vld [vmem:[#allocation4 + $0x28] sm:$0xf]
    %v980 = vld [vmem:[#allocation4 + $0x2c] sm:$0xf]
    %v981 = vld [vmem:[#allocation4 + $0x30] sm:$0xf]
    %v982 = vld [vmem:[#allocation4 + $0x34] sm:$0xf]
    %v983 = vld [vmem:[#allocation4 + $0x38] sm:$0xf]
    %v984 = vld [vmem:[#allocation4 + $0x3c] sm:$0xf]
    %v985 = vld [vmem:[%s9] sm:$0x1]
    %v987 = vperm.slane %v985, 0
    %v1005 = vunpack.c.l.b16 %v969
    %v1006 = vunpack.c.l.b16 %v970
    %v1007 = vunpack.c.l.b16 %v971
    %v1008 = vunpack.c.l.b16 %v972
    %v1009 = vunpack.c.l.b16 %v973
    %v1010 = vunpack.c.l.b16 %v974
    %v1011 = vunpack.c.l.b16 %v975
    %v1012 = vunpack.c.l.b16 %v976
    %v1013 = vunpack.c.l.b16 %v977
    %v1014 = vunpack.c.l.b16 %v978
    %v1015 = vunpack.c.l.b16 %v979
    %v1016 = vunpack.c.l.b16 %v980
    %v1017 = vunpack.c.l.b16 %v981
    %v1018 = vunpack.c.l.b16 %v982
    %v1019 = vunpack.c.l.b16 %v983
    %v1020 = vunpack.c.l.b16 %v984
    %v1021 = vpack.c.b16 %v1006, %v1005
    %v1022 = vpack.c.b16 %v1008, %v1007
    %v1023 = vpack.c.b16 %v1010, %v1009
    %v1024 = vpack.c.b16 %v1012, %v1011
    %v1025 = vpack.c.b16 %v1014, %v1013
    %v1026 = vpack.c.b16 %v1016, %v1015
    %v1027 = vpack.c.b16 %v1018, %v1017
    %v1028 = vpack.c.b16 %v1020, %v1019
    %1037 = vmatpush.bf16.msra.mxu0 %v1028
    %1038 = vmatpush.bf16.msra.mxu0 %v1027
    %1039 = vmatpush.bf16.msra.mxu0 %v1026
    %1040 = vmatpush.bf16.msra.mxu0 %v1025
    %1041 = vmatpush.bf16.msra.mxu0 %v1024
    %1042 = vmatpush.bf16.msra.mxu0 %v1023
    %1043 = vmatpush.bf16.msra.mxu0 %v1022
    %1044 = vmatpush.bf16.msra.mxu0 %v1021
    %1045 = vmatmul.bf16.gmra.mxu0 %v961
    %v1046 = vpop.f32.mrf.mxu0
    %v1047 = vadd.f32 %v987, %v1046
    %v1048 = vpop.f32.mrf.mxu0
    %v1049 = vadd.f32 %v987, %v1048
    %1050 = vmatmul.bf16.gmra.mxu0 %v962
    %v1051 = vpop.f32.mrf.mxu0
    %v1052 = vadd.f32 %v987, %v1051
    %v1053 = vpop.f32.mrf.mxu0
    %v1054 = vadd.f32 %v987, %v1053
    %1055 = vmatmul.bf16.gmra.mxu0 %v963
    %v1056 = vpop.f32.mrf.mxu0
    %v1057 = vadd.f32 %v987, %v1056
    %v1058 = vpop.f32.mrf.mxu0
    %v1059 = vadd.f32 %v987, %v1058
    %1060 = vmatmul.bf16.gmra.mxu0 %v964
    %v1061 = vpop.f32.mrf.mxu0
    %v1062 = vadd.f32 %v987, %v1061
    %v1063 = vpop.f32.mrf.mxu0
    %v1064 = vadd.f32 %v987, %v1063
    %1065 = vmatmul.bf16.gmra.mxu0 %v965
    %v1066 = vpop.f32.mrf.mxu0
    %v1067 = vadd.f32 %v987, %v1066
    %v1068 = vpop.f32.mrf.mxu0
    %v1069 = vadd.f32 %v987, %v1068
    %1070 = vmatmul.bf16.gmra.mxu0 %v966
    %v1071 = vpop.f32.mrf.mxu0
    %v1072 = vadd.f32 %v987, %v1071
    %v1073 = vpop.f32.mrf.mxu0
    %v1074 = vadd.f32 %v987, %v1073
    %1075 = vmatmul.bf16.gmra.mxu0 %v967
    %v1076 = vpop.f32.mrf.mxu0
    %v1077 = vadd.f32 %v987, %v1076
    %v1078 = vpop.f32.mrf.mxu0
    %v1079 = vadd.f32 %v987, %v1078
    %1080 = vmatmul.bf16.gmra.mxu0 %v968
    %v1081 = vpop.f32.mrf.mxu0
    %v1082 = vadd.f32 %v987, %v1081
    %v1083 = vpop.f32.mrf.mxu0
    %v1084 = vadd.f32 %v987, %v1083
    %1085 = vdwg.mxu0
    %v1086 = vmax.f32 %v1047, 0.0
    %v1087 = vmax.f32 %v1049, 0.0
    %v1088 = vmax.f32 %v1052, 0.0
    %v1089 = vmax.f32 %v1054, 0.0
    %v1090 = vmax.f32 %v1057, 0.0
    %v1091 = vmax.f32 %v1059, 0.0
    %v1092 = vmax.f32 %v1062, 0.0
    %v1093 = vmax.f32 %v1064, 0.0
    %v1094 = vmax.f32 %v1067, 0.0
    %v1095 = vmax.f32 %v1069, 0.0
    %v1096 = vmax.f32 %v1072, 0.0
    %v1097 = vmax.f32 %v1074, 0.0
    %v1098 = vmax.f32 %v1077, 0.0
    %v1099 = vmax.f32 %v1079, 0.0
    %v1100 = vmax.f32 %v1082, 0.0
    %v1101 = vmax.f32 %v1084, 0.0
    %v1102 = vpack.c.bf16 %v1087, %v1086
    %v1103 = vpack.c.bf16 %v1089, %v1088
    %v1104 = vpack.c.bf16 %v1091, %v1090
    %v1105 = vpack.c.bf16 %v1093, %v1092
    %v1106 = vpack.c.bf16 %v1095, %v1094
    %v1107 = vpack.c.bf16 %v1097, %v1096
    %v1108 = vpack.c.bf16 %v1099, %v1098
    %v1109 = vpack.c.bf16 %v1101, %v1100
    %v1110 = vld [vmem:[%s10] sm:$0xff]
    %v1111 = vld [vmem:[%s10 + $0x8] sm:$0xff]
    %v1112 = vld [vmem:[%s10 + $0x10] sm:$0xff]
    %v1113 = vld [vmem:[%s10 + $0x18] sm:$0xff]
    %v1114 = vld [vmem:[%s10 + $0x20] sm:$0xff]
    %v1115 = vld [vmem:[%s10 + $0x28] sm:$0xff]
    %v1116 = vld [vmem:[%s10 + $0x30] sm:$0xff]
    %v1117 = vld [vmem:[%s10 + $0x38] sm:$0xff]
    %v1118 = vld [vmem:[%s10 + $0x40] sm:$0xff]
    %v1119 = vld [vmem:[%s10 + $0x48] sm:$0xff]
    %v1120 = vld [vmem:[%s10 + $0x50] sm:$0xff]
    %v1121 = vld [vmem:[%s10 + $0x58] sm:$0xff]
    %v1122 = vld [vmem:[%s10 + $0x60] sm:$0xff]
    %v1123 = vld [vmem:[%s10 + $0x68] sm:$0xff]
    %v1124 = vld [vmem:[%s10 + $0x70] sm:$0xff]
    %v1125 = vld [vmem:[%s10 + $0x78] sm:$0xff]
    %v1126 = vld [vmem:[%s11] sm:$0x3]
    %v1128 = vperm.slane %v1126, 0
    %v1129 = vperm.slane %v1126, 1
    %v1148 = vunpack.c.l.b16 %v1110
    %v1149 = vunpack.c.h.b16 %v1110
    %v1150 = vunpack.c.l.b16 %v1111
    %v1151 = vunpack.c.h.b16 %v1111
    %v1152 = vunpack.c.l.b16 %v1112
    %v1153 = vunpack.c.h.b16 %v1112
    %v1154 = vunpack.c.l.b16 %v1113
    %v1155 = vunpack.c.h.b16 %v1113
    %v1156 = vunpack.c.l.b16 %v1114
    %v1157 = vunpack.c.h.b16 %v1114
    %v1158 = vunpack.c.l.b16 %v1115
    %v1159 = vunpack.c.h.b16 %v1115
    %v1160 = vunpack.c.l.b16 %v1116
    %v1161 = vunpack.c.h.b16 %v1116
    %v1162 = vunpack.c.l.b16 %v1117
    %v1163 = vunpack.c.h.b16 %v1117
    %v1164 = vunpack.c.l.b16 %v1118
    %v1165 = vunpack.c.h.b16 %v1118
    %v1166 = vunpack.c.l.b16 %v1119
    %v1167 = vunpack.c.h.b16 %v1119
    %v1168 = vunpack.c.l.b16 %v1120
    %v1169 = vunpack.c.h.b16 %v1120
    %v1170 = vunpack.c.l.b16 %v1121
    %v1171 = vunpack.c.h.b16 %v1121
    %v1172 = vunpack.c.l.b16 %v1122
    %v1173 = vunpack.c.h.b16 %v1122
    %v1174 = vunpack.c.l.b16 %v1123
    %v1175 = vunpack.c.h.b16 %v1123
    %v1176 = vunpack.c.l.b16 %v1124
    %v1177 = vunpack.c.h.b16 %v1124
    %v1178 = vunpack.c.l.b16 %v1125
    %v1179 = vunpack.c.h.b16 %v1125
    %v1180 = vpack.c.b16 %v1150, %v1148
    %v1181 = vpack.c.b16 %v1151, %v1149
    %v1182 = vpack.c.b16 %v1154, %v1152
    %v1183 = vpack.c.b16 %v1155, %v1153
    %v1184 = vpack.c.b16 %v1158, %v1156
    %v1185 = vpack.c.b16 %v1159, %v1157
    %v1186 = vpack.c.b16 %v1162, %v1160
    %v1187 = vpack.c.b16 %v1163, %v1161
    %v1188 = vpack.c.b16 %v1166, %v1164
    %v1189 = vpack.c.b16 %v1167, %v1165
    %v1190 = vpack.c.b16 %v1170, %v1168
    %v1191 = vpack.c.b16 %v1171, %v1169
    %v1192 = vpack.c.b16 %v1174, %v1172
    %v1193 = vpack.c.b16 %v1175, %v1173
    %v1194 = vpack.c.b16 %v1178, %v1176
    %v1195 = vpack.c.b16 %v1179, %v1177
    %1212 = vmatpush.bf16.msra.mxu0 %v1194
    %1213 = vmatpush.bf16.msra.mxu0 %v1192
    %1214 = vmatpush.bf16.msra.mxu0 %v1190
    %1215 = vmatpush.bf16.msra.mxu0 %v1188
    %1216 = vmatpush.bf16.msra.mxu0 %v1186
    %1217 = vmatpush.bf16.msra.mxu0 %v1184
    %1218 = vmatpush.bf16.msra.mxu0 %v1182
    %1219 = vmatpush.bf16.msra.mxu0 %v1180
    %1220 = vmatmul.bf16.gmra.mxu0 %v1102
    %v1221 = vpop.f32.mrf.mxu0
    %v1222 = vadd.f32 %v1128, %v1221
    %v1223 = vpop.f32.mrf.mxu0
    %v1224 = vadd.f32 %v1128, %v1223
    %1225 = vmatmul.bf16.gmra.mxu0 %v1103
    %v1226 = vpop.f32.mrf.mxu0
    %v1227 = vadd.f32 %v1128, %v1226
    %v1228 = vpop.f32.mrf.mxu0
    %v1229 = vadd.f32 %v1128, %v1228
    %1230 = vmatmul.bf16.gmra.mxu0 %v1104
    %v1231 = vpop.f32.mrf.mxu0
    %v1232 = vadd.f32 %v1128, %v1231
    %v1233 = vpop.f32.mrf.mxu0
    %v1234 = vadd.f32 %v1128, %v1233
    %1235 = vmatmul.bf16.gmra.mxu0 %v1105
    %v1236 = vpop.f32.mrf.mxu0
    %v1237 = vadd.f32 %v1128, %v1236
    %v1238 = vpop.f32.mrf.mxu0
    %v1239 = vadd.f32 %v1128, %v1238
    %1240 = vmatmul.bf16.gmra.mxu0 %v1106
    %v1241 = vpop.f32.mrf.mxu0
    %v1242 = vadd.f32 %v1128, %v1241
    %v1243 = vpop.f32.mrf.mxu0
    %v1244 = vadd.f32 %v1128, %v1243
    %1245 = vmatmul.bf16.gmra.mxu0 %v1107
    %v1246 = vpop.f32.mrf.mxu0
    %v1247 = vadd.f32 %v1128, %v1246
    %v1248 = vpop.f32.mrf.mxu0
    %v1249 = vadd.f32 %v1128, %v1248
    %1250 = vmatmul.bf16.gmra.mxu0 %v1108
    %v1251 = vpop.f32.mrf.mxu0
    %v1252 = vadd.f32 %v1128, %v1251
    %v1253 = vpop.f32.mrf.mxu0
    %v1254 = vadd.f32 %v1128, %v1253
    %1255 = vmatmul.bf16.gmra.mxu0 %v1109
    %v1256 = vpop.f32.mrf.mxu0
    %v1257 = vadd.f32 %v1128, %v1256
    %v1258 = vpop.f32.mrf.mxu0
    %v1259 = vadd.f32 %v1128, %v1258
    %1260 = vdwg.mxu0
    %1261 = vmatpush.bf16.msra.mxu0 %v1195
    %1262 = vmatpush.bf16.msra.mxu0 %v1193
    %1263 = vmatpush.bf16.msra.mxu0 %v1191
    %1264 = vmatpush.bf16.msra.mxu0 %v1189
    %1265 = vmatpush.bf16.msra.mxu0 %v1187
    %1266 = vmatpush.bf16.msra.mxu0 %v1185
    %1267 = vmatpush.bf16.msra.mxu0 %v1183
    %1268 = vmatpush.bf16.msra.mxu0 %v1181
    %1269 = vmatmul.bf16.gmra.mxu0 %v1102
    %v1270 = vpop.f32.mrf.mxu0
    %v1271 = vadd.f32 %v1129, %v1270
    %v1272 = vpop.f32.mrf.mxu0
    %v1273 = vadd.f32 %v1129, %v1272
    %1274 = vmatmul.bf16.gmra.mxu0 %v1103
    %v1275 = vpop.f32.mrf.mxu0
    %v1276 = vadd.f32 %v1129, %v1275
    %v1277 = vpop.f32.mrf.mxu0
    %v1278 = vadd.f32 %v1129, %v1277
    %1279 = vmatmul.bf16.gmra.mxu0 %v1104
    %v1280 = vpop.f32.mrf.mxu0
    %v1281 = vadd.f32 %v1129, %v1280
    %v1282 = vpop.f32.mrf.mxu0
    %v1283 = vadd.f32 %v1129, %v1282
    %1284 = vmatmul.bf16.gmra.mxu0 %v1105
    %v1285 = vpop.f32.mrf.mxu0
    %v1286 = vadd.f32 %v1129, %v1285
    %v1287 = vpop.f32.mrf.mxu0
    %v1288 = vadd.f32 %v1129, %v1287
    %1289 = vmatmul.bf16.gmra.mxu0 %v1106
    %v1290 = vpop.f32.mrf.mxu0
    %v1291 = vadd.f32 %v1129, %v1290
    %v1292 = vpop.f32.mrf.mxu0
    %v1293 = vadd.f32 %v1129, %v1292
    %1294 = vmatmul.bf16.gmra.mxu0 %v1107
    %v1295 = vpop.f32.mrf.mxu0
    %v1296 = vadd.f32 %v1129, %v1295
    %v1297 = vpop.f32.mrf.mxu0
    %v1298 = vadd.f32 %v1129, %v1297
    %1299 = vmatmul.bf16.gmra.mxu0 %v1108
    %v1300 = vpop.f32.mrf.mxu0
    %v1301 = vadd.f32 %v1129, %v1300
    %v1302 = vpop.f32.mrf.mxu0
    %v1303 = vadd.f32 %v1129, %v1302
    %1304 = vmatmul.bf16.gmra.mxu0 %v1109
    %v1305 = vpop.f32.mrf.mxu0
    %v1306 = vadd.f32 %v1129, %v1305
    %v1307 = vpop.f32.mrf.mxu0
    %v1308 = vadd.f32 %v1129, %v1307
    %1309 = vdwg.mxu0
    %v1310 = vmax.f32 %v1222, 0.0
    %v1311 = vmax.f32 %v1271, 0.0
    %v1312 = vmax.f32 %v1224, 0.0
    %v1313 = vmax.f32 %v1273, 0.0
    %v1314 = vmax.f32 %v1227, 0.0
    %v1315 = vmax.f32 %v1276, 0.0
    %v1316 = vmax.f32 %v1229, 0.0
    %v1317 = vmax.f32 %v1278, 0.0
    %v1318 = vmax.f32 %v1232, 0.0
    %v1319 = vmax.f32 %v1281, 0.0
    %v1320 = vmax.f32 %v1234, 0.0
    %v1321 = vmax.f32 %v1283, 0.0
    %v1322 = vmax.f32 %v1237, 0.0
    %v1323 = vmax.f32 %v1286, 0.0
    %v1324 = vmax.f32 %v1239, 0.0
    %v1325 = vmax.f32 %v1288, 0.0
    %v1326 = vmax.f32 %v1242, 0.0
    %v1327 = vmax.f32 %v1291, 0.0
    %v1328 = vmax.f32 %v1244, 0.0
    %v1329 = vmax.f32 %v1293, 0.0
    %v1330 = vmax.f32 %v1247, 0.0
    %v1331 = vmax.f32 %v1296, 0.0
    %v1332 = vmax.f32 %v1249, 0.0
    %v1333 = vmax.f32 %v1298, 0.0
    %v1334 = vmax.f32 %v1252, 0.0
    %v1335 = vmax.f32 %v1301, 0.0
    %v1336 = vmax.f32 %v1254, 0.0
    %v1337 = vmax.f32 %v1303, 0.0
    %v1338 = vmax.f32 %v1257, 0.0
    %v1339 = vmax.f32 %v1306, 0.0
    %v1340 = vmax.f32 %v1259, 0.0
    %v1341 = vmax.f32 %v1308, 0.0
    %v1342 = vpack.c.bf16 %v1312, %v1310
    %v1343 = vpack.c.bf16 %v1313, %v1311
    %v1344 = vpack.c.bf16 %v1316, %v1314
    %v1345 = vpack.c.bf16 %v1317, %v1315
    %v1346 = vpack.c.bf16 %v1320, %v1318
    %v1347 = vpack.c.bf16 %v1321, %v1319
    %v1348 = vpack.c.bf16 %v1324, %v1322
    %v1349 = vpack.c.bf16 %v1325, %v1323
    %v1350 = vpack.c.bf16 %v1328, %v1326
    %v1351 = vpack.c.bf16 %v1329, %v1327
    %v1352 = vpack.c.bf16 %v1332, %v1330
    %v1353 = vpack.c.bf16 %v1333, %v1331
    %v1354 = vpack.c.bf16 %v1336, %v1334
    %v1355 = vpack.c.bf16 %v1337, %v1335
    %v1356 = vpack.c.bf16 %v1340, %v1338
    %v1357 = vpack.c.bf16 %v1341, %v1339
    %v1358 = vld [vmem:[%s12] sm:$0xf]
    %v1359 = vld [vmem:[%s12 + $0x4] sm:$0xf]
    %v1360 = vld [vmem:[%s12 + $0x8] sm:$0xf]
    %v1361 = vld [vmem:[%s12 + $0xc] sm:$0xf]
    %v1362 = vld [vmem:[%s12 + $0x10] sm:$0xf]
    %v1363 = vld [vmem:[%s12 + $0x14] sm:$0xf]
    %v1364 = vld [vmem:[%s12 + $0x18] sm:$0xf]
    %v1365 = vld [vmem:[%s12 + $0x1c] sm:$0xf]
    %v1366 = vld [vmem:[%s12 + $0x20] sm:$0xf]
    %v1367 = vld [vmem:[%s12 + $0x24] sm:$0xf]
    %v1368 = vld [vmem:[%s12 + $0x28] sm:$0xf]
    %v1369 = vld [vmem:[%s12 + $0x2c] sm:$0xf]
    %v1370 = vld [vmem:[%s12 + $0x30] sm:$0xf]
    %v1371 = vld [vmem:[%s12 + $0x34] sm:$0xf]
    %v1372 = vld [vmem:[%s12 + $0x38] sm:$0xf]
    %v1373 = vld [vmem:[%s12 + $0x3c] sm:$0xf]
    %v1374 = vld [vmem:[%s12 + $0x40] sm:$0xf]
    %v1375 = vld [vmem:[%s12 + $0x44] sm:$0xf]
    %v1376 = vld [vmem:[%s12 + $0x48] sm:$0xf]
    %v1377 = vld [vmem:[%s12 + $0x4c] sm:$0xf]
    %v1378 = vld [vmem:[%s12 + $0x50] sm:$0xf]
    %v1379 = vld [vmem:[%s12 + $0x54] sm:$0xf]
    %v1380 = vld [vmem:[%s12 + $0x58] sm:$0xf]
    %v1381 = vld [vmem:[%s12 + $0x5c] sm:$0xf]
    %v1382 = vld [vmem:[%s12 + $0x60] sm:$0xf]
    %v1383 = vld [vmem:[%s12 + $0x64] sm:$0xf]
    %v1384 = vld [vmem:[%s12 + $0x68] sm:$0xf]
    %v1385 = vld [vmem:[%s12 + $0x6c] sm:$0xf]
    %v1386 = vld [vmem:[%s12 + $0x70] sm:$0xf]
    %v1387 = vld [vmem:[%s12 + $0x74] sm:$0xf]
    %v1388 = vld [vmem:[%s12 + $0x78] sm:$0xf]
    %v1389 = vld [vmem:[%s12 + $0x7c] sm:$0xf]
    %v1390 = vld [vmem:[%s13] sm:$0x1]
    %v1392 = vperm.slane %v1390, 0
    %v1426 = vunpack.c.l.b16 %v1358
    %v1427 = vunpack.c.l.b16 %v1359
    %v1428 = vunpack.c.l.b16 %v1360
    %v1429 = vunpack.c.l.b16 %v1361
    %v1430 = vunpack.c.l.b16 %v1362
    %v1431 = vunpack.c.l.b16 %v1363
    %v1432 = vunpack.c.l.b16 %v1364
    %v1433 = vunpack.c.l.b16 %v1365
    %v1434 = vunpack.c.l.b16 %v1366
    %v1435 = vunpack.c.l.b16 %v1367
    %v1436 = vunpack.c.l.b16 %v1368
    %v1437 = vunpack.c.l.b16 %v1369
    %v1438 = vunpack.c.l.b16 %v1370
    %v1439 = vunpack.c.l.b16 %v1371
    %v1440 = vunpack.c.l.b16 %v1372
    %v1441 = vunpack.c.l.b16 %v1373
    %v1442 = vunpack.c.l.b16 %v1374
    %v1443 = vunpack.c.l.b16 %v1375
    %v1444 = vunpack.c.l.b16 %v1376
    %v1445 = vunpack.c.l.b16 %v1377
    %v1446 = vunpack.c.l.b16 %v1378
    %v1447 = vunpack.c.l.b16 %v1379
    %v1448 = vunpack.c.l.b16 %v1380
    %v1449 = vunpack.c.l.b16 %v1381
    %v1450 = vunpack.c.l.b16 %v1382
    %v1451 = vunpack.c.l.b16 %v1383
    %v1452 = vunpack.c.l.b16 %v1384
    %v1453 = vunpack.c.l.b16 %v1385
    %v1454 = vunpack.c.l.b16 %v1386
    %v1455 = vunpack.c.l.b16 %v1387
    %v1456 = vunpack.c.l.b16 %v1388
    %v1457 = vunpack.c.l.b16 %v1389
    %v1458 = vpack.c.b16 %v1427, %v1426
    %v1459 = vpack.c.b16 %v1429, %v1428
    %v1460 = vpack.c.b16 %v1431, %v1430
    %v1461 = vpack.c.b16 %v1433, %v1432
    %v1462 = vpack.c.b16 %v1435, %v1434
    %v1463 = vpack.c.b16 %v1437, %v1436
    %v1464 = vpack.c.b16 %v1439, %v1438
    %v1465 = vpack.c.b16 %v1441, %v1440
    %v1466 = vpack.c.b16 %v1443, %v1442
    %v1467 = vpack.c.b16 %v1445, %v1444
    %v1468 = vpack.c.b16 %v1447, %v1446
    %v1469 = vpack.c.b16 %v1449, %v1448
    %v1470 = vpack.c.b16 %v1451, %v1450
    %v1471 = vpack.c.b16 %v1453, %v1452
    %v1472 = vpack.c.b16 %v1455, %v1454
    %v1473 = vpack.c.b16 %v1457, %v1456
    %1490 = vmatpush.bf16.msra.mxu0 %v1465
    %1491 = vmatpush.bf16.msra.mxu0 %v1464
    %1492 = vmatpush.bf16.msra.mxu0 %v1463
    %1493 = vmatpush.bf16.msra.mxu0 %v1462
    %1494 = vmatpush.bf16.msra.mxu0 %v1461
    %1495 = vmatpush.bf16.msra.mxu0 %v1460
    %1496 = vmatpush.bf16.msra.mxu0 %v1459
    %1497 = vmatpush.bf16.msra.mxu0 %v1458
    %1498 = vmatmul.bf16.gmra.mxu0 %v1342
    %v1499 = vpop.f32.mrf.mxu0
    %v1500 = vadd.f32 %v1392, %v1499
    %v1501 = vpop.f32.mrf.mxu0
    %v1502 = vadd.f32 %v1392, %v1501
    %1503 = vmatmul.bf16.gmra.mxu0 %v1344
    %v1504 = vpop.f32.mrf.mxu0
    %v1505 = vadd.f32 %v1392, %v1504
    %v1506 = vpop.f32.mrf.mxu0
    %v1507 = vadd.f32 %v1392, %v1506
    %1508 = vmatmul.bf16.gmra.mxu0 %v1346
    %v1509 = vpop.f32.mrf.mxu0
    %v1510 = vadd.f32 %v1392, %v1509
    %v1511 = vpop.f32.mrf.mxu0
    %v1512 = vadd.f32 %v1392, %v1511
    %1513 = vmatmul.bf16.gmra.mxu0 %v1348
    %v1514 = vpop.f32.mrf.mxu0
    %v1515 = vadd.f32 %v1392, %v1514
    %v1516 = vpop.f32.mrf.mxu0
    %v1517 = vadd.f32 %v1392, %v1516
    %1518 = vmatmul.bf16.gmra.mxu0 %v1350
    %v1519 = vpop.f32.mrf.mxu0
    %v1520 = vadd.f32 %v1392, %v1519
    %v1521 = vpop.f32.mrf.mxu0
    %v1522 = vadd.f32 %v1392, %v1521
    %1523 = vmatmul.bf16.gmra.mxu0 %v1352
    %v1524 = vpop.f32.mrf.mxu0
    %v1525 = vadd.f32 %v1392, %v1524
    %v1526 = vpop.f32.mrf.mxu0
    %v1527 = vadd.f32 %v1392, %v1526
    %1528 = vmatmul.bf16.gmra.mxu0 %v1354
    %v1529 = vpop.f32.mrf.mxu0
    %v1530 = vadd.f32 %v1392, %v1529
    %v1531 = vpop.f32.mrf.mxu0
    %v1532 = vadd.f32 %v1392, %v1531
    %1533 = vmatmul.bf16.gmra.mxu0 %v1356
    %v1534 = vpop.f32.mrf.mxu0
    %v1535 = vadd.f32 %v1392, %v1534
    %v1536 = vpop.f32.mrf.mxu0
    %v1537 = vadd.f32 %v1392, %v1536
    %1538 = vdwg.mxu0
    %1539 = vmatpush.bf16.msra.mxu0 %v1473
    %1540 = vmatpush.bf16.msra.mxu0 %v1472
    %1541 = vmatpush.bf16.msra.mxu0 %v1471
    %1542 = vmatpush.bf16.msra.mxu0 %v1470
    %1543 = vmatpush.bf16.msra.mxu0 %v1469
    %1544 = vmatpush.bf16.msra.mxu0 %v1468
    %1545 = vmatpush.bf16.msra.mxu0 %v1467
    %1546 = vmatpush.bf16.msra.mxu0 %v1466
    %1547 = vmatmul.bf16.gmra.mxu0 %v1343
    %v1548 = vpop.f32.mrf.mxu0
    %v1549 = vadd.f32 %v1500, %v1548
    %v1550 = vpop.f32.mrf.mxu0
    %v1551 = vadd.f32 %v1502, %v1550
    %1552 = vmatmul.bf16.gmra.mxu0 %v1345
    %v1553 = vpop.f32.mrf.mxu0
    %v1554 = vadd.f32 %v1505, %v1553
    %v1555 = vpop.f32.mrf.mxu0
    %v1556 = vadd.f32 %v1507, %v1555
    %1557 = vmatmul.bf16.gmra.mxu0 %v1347
    %v1558 = vpop.f32.mrf.mxu0
    %v1559 = vadd.f32 %v1510, %v1558
    %v1560 = vpop.f32.mrf.mxu0
    %v1561 = vadd.f32 %v1512, %v1560
    %1562 = vmatmul.bf16.gmra.mxu0 %v1349
    %v1563 = vpop.f32.mrf.mxu0
    %v1564 = vadd.f32 %v1515, %v1563
    %v1565 = vpop.f32.mrf.mxu0
    %v1566 = vadd.f32 %v1517, %v1565
    %1567 = vmatmul.bf16.gmra.mxu0 %v1351
    %v1568 = vpop.f32.mrf.mxu0
    %v1569 = vadd.f32 %v1520, %v1568
    %v1570 = vpop.f32.mrf.mxu0
    %v1571 = vadd.f32 %v1522, %v1570
    %1572 = vmatmul.bf16.gmra.mxu0 %v1353
    %v1573 = vpop.f32.mrf.mxu0
    %v1574 = vadd.f32 %v1525, %v1573
    %v1575 = vpop.f32.mrf.mxu0
    %v1576 = vadd.f32 %v1527, %v1575
    %1577 = vmatmul.bf16.gmra.mxu0 %v1355
    %v1578 = vpop.f32.mrf.mxu0
    %v1579 = vadd.f32 %v1530, %v1578
    %v1580 = vpop.f32.mrf.mxu0
    %v1581 = vadd.f32 %v1532, %v1580
    %1582 = vmatmul.bf16.gmra.mxu0 %v1357
    %v1583 = vpop.f32.mrf.mxu0
    %v1584 = vadd.f32 %v1535, %v1583
    %v1585 = vpop.f32.mrf.mxu0
    %v1586 = vadd.f32 %v1537, %v1585
    %1587 = vdwg.mxu0
    %v1588 = vpack.c.bf16 %v835, %v833
    %v1589 = vpack.c.bf16 %v836, %v834
    %v1590 = vpack.c.bf16 %v839, %v837
    %v1591 = vpack.c.bf16 %v840, %v838
    %v1592 = vpack.c.bf16 %v843, %v841
    %v1593 = vpack.c.bf16 %v844, %v842
    %v1594 = vpack.c.bf16 %v847, %v845
    %v1595 = vpack.c.bf16 %v848, %v846
    %v1596 = vpack.c.bf16 %v851, %v849
    %v1597 = vpack.c.bf16 %v852, %v850
    %v1598 = vpack.c.bf16 %v855, %v853
    %v1599 = vpack.c.bf16 %v856, %v854
    %v1600 = vpack.c.bf16 %v859, %v857
    %v1601 = vpack.c.bf16 %v860, %v858
    %v1602 = vpack.c.bf16 %v863, %v861
    %v1603 = vpack.c.bf16 %v864, %v862
    %v1604 = vld [vmem:[#allocation6] sm:$0xf]
    %v1605 = vld [vmem:[#allocation6 + $0x4] sm:$0xf]
    %v1606 = vld [vmem:[#allocation6 + $0x8] sm:$0xf]
    %v1607 = vld [vmem:[#allocation6 + $0xc] sm:$0xf]
    %v1608 = vld [vmem:[#allocation6 + $0x10] sm:$0xf]
    %v1609 = vld [vmem:[#allocation6 + $0x14] sm:$0xf]
    %v1610 = vld [vmem:[#allocation6 + $0x18] sm:$0xf]
    %v1611 = vld [vmem:[#allocation6 + $0x1c] sm:$0xf]
    %v1612 = vld [vmem:[#allocation6 + $0x20] sm:$0xf]
    %v1613 = vld [vmem:[#allocation6 + $0x24] sm:$0xf]
    %v1614 = vld [vmem:[#allocation6 + $0x28] sm:$0xf]
    %v1615 = vld [vmem:[#allocation6 + $0x2c] sm:$0xf]
    %v1616 = vld [vmem:[#allocation6 + $0x30] sm:$0xf]
    %v1617 = vld [vmem:[#allocation6 + $0x34] sm:$0xf]
    %v1618 = vld [vmem:[#allocation6 + $0x38] sm:$0xf]
    %v1619 = vld [vmem:[#allocation6 + $0x3c] sm:$0xf]
    %v1620 = vld [vmem:[#allocation6 + $0x40] sm:$0xf]
    %v1621 = vld [vmem:[#allocation6 + $0x44] sm:$0xf]
    %v1622 = vld [vmem:[#allocation6 + $0x48] sm:$0xf]
    %v1623 = vld [vmem:[#allocation6 + $0x4c] sm:$0xf]
    %v1624 = vld [vmem:[#allocation6 + $0x50] sm:$0xf]
    %v1625 = vld [vmem:[#allocation6 + $0x54] sm:$0xf]
    %v1626 = vld [vmem:[#allocation6 + $0x58] sm:$0xf]
    %v1627 = vld [vmem:[#allocation6 + $0x5c] sm:$0xf]
    %v1628 = vld [vmem:[#allocation6 + $0x60] sm:$0xf]
    %v1629 = vld [vmem:[#allocation6 + $0x64] sm:$0xf]
    %v1630 = vld [vmem:[#allocation6 + $0x68] sm:$0xf]
    %v1631 = vld [vmem:[#allocation6 + $0x6c] sm:$0xf]
    %v1632 = vld [vmem:[#allocation6 + $0x70] sm:$0xf]
    %v1633 = vld [vmem:[#allocation6 + $0x74] sm:$0xf]
    %v1634 = vld [vmem:[#allocation6 + $0x78] sm:$0xf]
    %v1635 = vld [vmem:[#allocation6 + $0x7c] sm:$0xf]
    %v1668 = vunpack.c.l.b16 %v1604
    %v1669 = vunpack.c.l.b16 %v1605
    %v1670 = vunpack.c.l.b16 %v1606
    %v1671 = vunpack.c.l.b16 %v1607
    %v1672 = vunpack.c.l.b16 %v1608
    %v1673 = vunpack.c.l.b16 %v1609
    %v1674 = vunpack.c.l.b16 %v1610
    %v1675 = vunpack.c.l.b16 %v1611
    %v1676 = vunpack.c.l.b16 %v1612
    %v1677 = vunpack.c.l.b16 %v1613
    %v1678 = vunpack.c.l.b16 %v1614
    %v1679 = vunpack.c.l.b16 %v1615
    %v1680 = vunpack.c.l.b16 %v1616
    %v1681 = vunpack.c.l.b16 %v1617
    %v1682 = vunpack.c.l.b16 %v1618
    %v1683 = vunpack.c.l.b16 %v1619
    %v1684 = vunpack.c.l.b16 %v1620
    %v1685 = vunpack.c.l.b16 %v1621
    %v1686 = vunpack.c.l.b16 %v1622
    %v1687 = vunpack.c.l.b16 %v1623
    %v1688 = vunpack.c.l.b16 %v1624
    %v1689 = vunpack.c.l.b16 %v1625
    %v1690 = vunpack.c.l.b16 %v1626
    %v1691 = vunpack.c.l.b16 %v1627
    %v1692 = vunpack.c.l.b16 %v1628
    %v1693 = vunpack.c.l.b16 %v1629
    %v1694 = vunpack.c.l.b16 %v1630
    %v1695 = vunpack.c.l.b16 %v1631
    %v1696 = vunpack.c.l.b16 %v1632
    %v1697 = vunpack.c.l.b16 %v1633
    %v1698 = vunpack.c.l.b16 %v1634
    %v1699 = vunpack.c.l.b16 %v1635
    %v1700 = vpack.c.b16 %v1669, %v1668
    %v1701 = vpack.c.b16 %v1671, %v1670
    %v1702 = vpack.c.b16 %v1673, %v1672
    %v1703 = vpack.c.b16 %v1675, %v1674
    %v1704 = vpack.c.b16 %v1677, %v1676
    %v1705 = vpack.c.b16 %v1679, %v1678
    %v1706 = vpack.c.b16 %v1681, %v1680
    %v1707 = vpack.c.b16 %v1683, %v1682
    %v1708 = vpack.c.b16 %v1685, %v1684
    %v1709 = vpack.c.b16 %v1687, %v1686
    %v1710 = vpack.c.b16 %v1689, %v1688
    %v1711 = vpack.c.b16 %v1691, %v1690
    %v1712 = vpack.c.b16 %v1693, %v1692
    %v1713 = vpack.c.b16 %v1695, %v1694
    %v1714 = vpack.c.b16 %v1697, %v1696
    %v1715 = vpack.c.b16 %v1699, %v1698
    %1732 = vmatpush.bf16.msra.mxu0 %v1707
    %1733 = vmatpush.bf16.msra.mxu0 %v1706
    %1734 = vmatpush.bf16.msra.mxu0 %v1705
    %1735 = vmatpush.bf16.msra.mxu0 %v1704
    %1736 = vmatpush.bf16.msra.mxu0 %v1703
    %1737 = vmatpush.bf16.msra.mxu0 %v1702
    %1738 = vmatpush.bf16.msra.mxu0 %v1701
    %1739 = vmatpush.bf16.msra.mxu0 %v1700
    %1740 = vmatmul.bf16.gmra.mxu0 %v1588
    %v1741 = vpop.f32.mrf.mxu0
    %v1742 = vadd.f32 0.0, %v1741
    %v1743 = vpop.f32.mrf.mxu0
    %v1744 = vadd.f32 0.0, %v1743
    %1745 = vmatmul.bf16.gmra.mxu0 %v1590
    %v1746 = vpop.f32.mrf.mxu0
    %v1747 = vadd.f32 0.0, %v1746
    %v1748 = vpop.f32.mrf.mxu0
    %v1749 = vadd.f32 0.0, %v1748
    %1750 = vmatmul.bf16.gmra.mxu0 %v1592
    %v1751 = vpop.f32.mrf.mxu0
    %v1752 = vadd.f32 0.0, %v1751
    %v1753 = vpop.f32.mrf.mxu0
    %v1754 = vadd.f32 0.0, %v1753
    %1755 = vmatmul.bf16.gmra.mxu0 %v1594
    %v1756 = vpop.f32.mrf.mxu0
    %v1757 = vadd.f32 0.0, %v1756
    %v1758 = vpop.f32.mrf.mxu0
    %v1759 = vadd.f32 0.0, %v1758
    %1760 = vmatmul.bf16.gmra.mxu0 %v1596
    %v1761 = vpop.f32.mrf.mxu0
    %v1762 = vadd.f32 0.0, %v1761
    %v1763 = vpop.f32.mrf.mxu0
    %v1764 = vadd.f32 0.0, %v1763
    %1765 = vmatmul.bf16.gmra.mxu0 %v1598
    %v1766 = vpop.f32.mrf.mxu0
    %v1767 = vadd.f32 0.0, %v1766
    %v1768 = vpop.f32.mrf.mxu0
    %v1769 = vadd.f32 0.0, %v1768
    %1770 = vmatmul.bf16.gmra.mxu0 %v1600
    %v1771 = vpop.f32.mrf.mxu0
    %v1772 = vadd.f32 0.0, %v1771
    %v1773 = vpop.f32.mrf.mxu0
    %v1774 = vadd.f32 0.0, %v1773
    %1775 = vmatmul.bf16.gmra.mxu0 %v1602
    %v1776 = vpop.f32.mrf.mxu0
    %v1777 = vadd.f32 0.0, %v1776
    %v1778 = vpop.f32.mrf.mxu0
    %v1779 = vadd.f32 0.0, %v1778
    %1780 = vdwg.mxu0
    %1781 = vmatpush.bf16.msra.mxu0 %v1715
    %1782 = vmatpush.bf16.msra.mxu0 %v1714
    %1783 = vmatpush.bf16.msra.mxu0 %v1713
    %1784 = vmatpush.bf16.msra.mxu0 %v1712
    %1785 = vmatpush.bf16.msra.mxu0 %v1711
    %1786 = vmatpush.bf16.msra.mxu0 %v1710
    %1787 = vmatpush.bf16.msra.mxu0 %v1709
    %1788 = vmatpush.bf16.msra.mxu0 %v1708
    %1789 = vmatmul.bf16.gmra.mxu0 %v1589
    %v1790 = vpop.f32.mrf.mxu0
    %v1791 = vadd.f32 %v1742, %v1790
    %v1792 = vpop.f32.mrf.mxu0
    %v1793 = vadd.f32 %v1744, %v1792
    %1794 = vmatmul.bf16.gmra.mxu0 %v1591
    %v1795 = vpop.f32.mrf.mxu0
    %v1796 = vadd.f32 %v1747, %v1795
    %v1797 = vpop.f32.mrf.mxu0
    %v1798 = vadd.f32 %v1749, %v1797
    %1799 = vmatmul.bf16.gmra.mxu0 %v1593
    %v1800 = vpop.f32.mrf.mxu0
    %v1801 = vadd.f32 %v1752, %v1800
    %v1802 = vpop.f32.mrf.mxu0
    %v1803 = vadd.f32 %v1754, %v1802
    %1804 = vmatmul.bf16.gmra.mxu0 %v1595
    %v1805 = vpop.f32.mrf.mxu0
    %v1806 = vadd.f32 %v1757, %v1805
    %v1807 = vpop.f32.mrf.mxu0
    %v1808 = vadd.f32 %v1759, %v1807
    %1809 = vmatmul.bf16.gmra.mxu0 %v1597
    %v1810 = vpop.f32.mrf.mxu0
    %v1811 = vadd.f32 %v1762, %v1810
    %v1812 = vpop.f32.mrf.mxu0
    %v1813 = vadd.f32 %v1764, %v1812
    %1814 = vmatmul.bf16.gmra.mxu0 %v1599
    %v1815 = vpop.f32.mrf.mxu0
    %v1816 = vadd.f32 %v1767, %v1815
    %v1817 = vpop.f32.mrf.mxu0
    %v1818 = vadd.f32 %v1769, %v1817
    %1819 = vmatmul.bf16.gmra.mxu0 %v1601
    %v1820 = vpop.f32.mrf.mxu0
    %v1821 = vadd.f32 %v1772, %v1820
    %v1822 = vpop.f32.mrf.mxu0
    %v1823 = vadd.f32 %v1774, %v1822
    %1824 = vmatmul.bf16.gmra.mxu0 %v1603
    %v1825 = vpop.f32.mrf.mxu0
    %v1826 = vadd.f32 %v1777, %v1825
    %v1827 = vpop.f32.mrf.mxu0
    %v1828 = vadd.f32 %v1779, %v1827
    %1829 = vdwg.mxu0
    %v1830 = vadd.f32 %v1549, %v1791
    %v1831 = vadd.f32 %v1551, %v1793
    %v1832 = vadd.f32 %v1554, %v1796
    %v1833 = vadd.f32 %v1556, %v1798
    %v1834 = vadd.f32 %v1559, %v1801
    %v1835 = vadd.f32 %v1561, %v1803
    %v1836 = vadd.f32 %v1564, %v1806
    %v1837 = vadd.f32 %v1566, %v1808
    %v1838 = vadd.f32 %v1569, %v1811
    %v1839 = vadd.f32 %v1571, %v1813
    %v1840 = vadd.f32 %v1574, %v1816
    %v1841 = vadd.f32 %v1576, %v1818
    %v1842 = vadd.f32 %v1579, %v1821
    %v1843 = vadd.f32 %v1581, %v1823
    %v1844 = vadd.f32 %v1584, %v1826
    %v1845 = vadd.f32 %v1586, %v1828
    %v1846 = vpack.c.bf16 %v1830, %v1830
    %v1847 = vpack.c.bf16 %v1831, %v1831
    %v1848 = vpack.c.bf16 %v1832, %v1832
    %v1849 = vpack.c.bf16 %v1833, %v1833
    %v1850 = vpack.c.bf16 %v1834, %v1834
    %v1851 = vpack.c.bf16 %v1835, %v1835
    %v1852 = vpack.c.bf16 %v1836, %v1836
    %v1853 = vpack.c.bf16 %v1837, %v1837
    %v1854 = vpack.c.bf16 %v1838, %v1838
    %v1855 = vpack.c.bf16 %v1839, %v1839
    %v1856 = vpack.c.bf16 %v1840, %v1840
    %v1857 = vpack.c.bf16 %v1841, %v1841
    %v1858 = vpack.c.bf16 %v1842, %v1842
    %v1859 = vpack.c.bf16 %v1843, %v1843
    %v1860 = vpack.c.bf16 %v1844, %v1844
    %v1861 = vpack.c.bf16 %v1845, %v1845
    %1862 = vst [vmem:[%s15] sm:$0xf] %v1846
    %1863 = vst [vmem:[%s15 + $0x4] sm:$0xf] %v1847
    %1864 = vst [vmem:[%s15 + $0x8] sm:$0xf] %v1848
    %1865 = vst [vmem:[%s15 + $0xc] sm:$0xf] %v1849
    %1866 = vst [vmem:[%s15 + $0x10] sm:$0xf] %v1850
    %1867 = vst [vmem:[%s15 + $0x14] sm:$0xf] %v1851
    %1868 = vst [vmem:[%s15 + $0x18] sm:$0xf] %v1852
    %1869 = vst [vmem:[%s15 + $0x1c] sm:$0xf] %v1853
    %1870 = vst [vmem:[%s15 + $0x20] sm:$0xf] %v1854
    %1871 = vst [vmem:[%s15 + $0x24] sm:$0xf] %v1855
    %1872 = vst [vmem:[%s15 + $0x28] sm:$0xf] %v1856
    %1873 = vst [vmem:[%s15 + $0x2c] sm:$0xf] %v1857
    %1874 = vst [vmem:[%s15 + $0x30] sm:$0xf] %v1858
    %1875 = vst [vmem:[%s15 + $0x34] sm:$0xf] %v1859
    %1876 = vst [vmem:[%s15 + $0x38] sm:$0xf] %v1860
    %1877 = vst [vmem:[%s15 + $0x3c] sm:$0xf] %v1861
    // Predicated region
    $region74: #{vae_forward.1} parent=1 // pred_check
      _
    $region75: #{vae_forward.1} parent=1 // pred_check_branch
      %1879 = sbr.rel (0) target = $region77
    $region76: #{vae_forward.1} parent=1 // pred_region
      _
    $region77: #{vae_forward.1} parent=1 // pred_fallthru
      _
    // Predicated region
    $region78: #{vae_forward.1} parent=1 // pred_check
      _
    $region79: #{vae_forward.1} parent=1 // pred_check_branch
      %1881 = sbr.rel (0) target = $region81
    $region80: #{vae_forward.1} parent=1 // pred_region
      _
    $region81: #{vae_forward.1} parent=1 // pred_fallthru
      _
    %1882 = vsyncpa [#allocation3], 1
    %1883 = vsyncpa [#allocation5], 1

</llo_original>
